<compile_context>
chip_gen: v7x
topology: tpu7x:2x2x1
jax: 0.10.0
libtpu: 0.0.40
codegen_flags: <defaults>
</compile_context>

<pallas_src>
import functools

import jax
import jax.numpy as jnp
from jax.experimental import pallas as pl
from jax.experimental.pallas import tpu as pltpu

_NEG_BIG = -1e30     # additive mask value; exp() underflows to exactly 0
_SCORE_COLS = 16     # lanes 0..7: per-head src scores, lanes 8..15: dst scores


def _round_up(v, m):
    return (v + m - 1) // m * m


def _vmem_capacity_bytes():
    """Per-TensorCore VMEM capacity; conservative (v7x-sized) fallback."""
    try:
        cap = getattr(pltpu.get_tpu_info(), "vmem_capacity_bytes", None)
        if cap:
            return int(cap)
    except Exception:
        pass
    return 64 * 2 ** 20


def _softmax_dtype():
    """bf16 N^2 softmax elementwise only on bf16-VPU/EUP chips (v6e / v7x)."""
    try:
        kind = jax.devices()[0].device_kind.lower()
    except Exception:
        return jnp.float32
    if any(tag in kind for tag in ("v6", "v7", "7x")):
        return jnp.bfloat16
    return jnp.float32


# ----------------------------------------------------------------------------
# kernels
# ----------------------------------------------------------------------------
def _proj_kernel(x_ref, w_ref, a_ref, xp_ref, s_ref):
    """Row-local projection: xp = x @ W (bf16 MXU, f32 acc); scores = xp @ A."""
    xp = jnp.dot(x_ref[...].astype(jnp.bfloat16),
                 w_ref[...].astype(jnp.bfloat16),
                 preferred_element_type=jnp.float32)
    s_ref[...] = jnp.dot(xp, a_ref[...], preferred_element_type=jnp.float32)
    xp_ref[...] = xp.astype(jnp.bfloat16)


def _attention_agg(mask_bias, s_dst, s_all_t, xp_bf, *, heads, fo,
                   negative_slope, compute_dtype):
    """Masked-softmax attention + aggregation for one dst-row tile.

    mask_bias : [tm, N]  compute_dtype additive mask (0 on edges, -1e30 else)
    s_dst     : [tm, 16] f32 scores of this tile's rows (dst cols 8..)
    s_all_t   : [16, N]  compute_dtype scores of ALL nodes, transposed (src rows 0..)
    xp_bf     : [N, heads*fo] bf16 transformed source features
    returns   : [tm, heads*fo] f32
    """
    f32, bf16 = jnp.float32, jnp.bfloat16
    half = _SCORE_COLS // 2
    outs = []
    for h in range(heads):
        d = s_dst[:, half + h:half + h + 1].astype(compute_dtype)   # [tm, 1]
        s = s_all_t[h:h + 1, :]                                     # [1, N]
        logits = d + s                                              # [tm, N]
        logits = jnp.where(logits >= 0, logits, negative_slope * logits)
        masked = logits + mask_bias                                 # non-edges -> -1e30
        m = jnp.max(masked, axis=1, keepdims=True)
        p = jnp.exp(masked - m)                                     # off-graph -> exactly 0
        denom = jnp.sum(p, axis=1, keepdims=True).astype(f32)
        inv = pl.reciprocal(denom, approx=True)                     # divide on the EUP
        xh = xp_bf[:, h * fo:(h + 1) * fo]
        # normalization folded past the matmul: scale [tm, fo], not [tm, N]
        outs.append(jnp.dot(p.astype(bf16), xh,
                            preferred_element_type=f32) * inv)
    return jnp.concatenate(outs, axis=1) if heads > 1 else outs[0]


def _attn_relu_proj_kernel(mask_ref, sdst_ref, sall_ref, xp_ref, b_ref,
                           w2_ref, a2_ref, xp2_ref, s2_ref, *,
                           heads, fo, negative_slope, compute_dtype):
    """Layer-1 attention + bias + ReLU, fused with the (row-local) layer-2 projection."""
    mask = mask_ref[...].astype(compute_dtype)          # one cast/tile (no-op on bf16 path)
    s_all_t = sall_ref[...].T.astype(compute_dtype)     # one transpose shared by all heads
    agg = _attention_agg(mask, sdst_ref[...], s_all_t, xp_ref[...],
                         heads=heads, fo=fo, negative_slope=negative_slope,
                         compute_dtype=compute_dtype)
    h1 = jnp.maximum(agg + b_ref[...], 0.0)             # fused nn.ReLU
    xp2 = jnp.dot(h1.astype(jnp.bfloat16), w2_ref[...].astype(jnp.bfloat16),
                  preferred_element_type=jnp.float32)
    s2_ref[...] = jnp.dot(xp2, a2_ref[...], preferred_element_type=jnp.float32)
    xp2_ref[...] = xp2.astype(jnp.bfloat16)


def _attn_out_kernel(mask_ref, sdst_ref, sall_ref, xp_ref, b_ref, out_ref, *,
                     heads, fo, negative_slope, compute_dtype):
    """Layer-2 attention (heads=1, concat=False -> mean == identity) + bias."""
    mask = mask_ref[...].astype(compute_dtype)
    s_all_t = sall_ref[...].T.astype(compute_dtype)
    agg = _attention_agg(mask, sdst_ref[...], s_all_t, xp_ref[...],
                         heads=heads, fo=fo, negative_slope=negative_slope,
                         compute_dtype=compute_dtype)
    out_ref[...] = agg + b_ref[...]


# ----------------------------------------------------------------------------
# wrapper
# ----------------------------------------------------------------------------
def build_adjacency(edge_index, num_nodes):
    """Dense {0,1} adjacency: adj[i, j] = 1 iff edge j -> i (plus self-loops).
    Note: duplicate (src, dst) edges collapse to a single edge here."""
    src, dst = edge_index[0], edge_index[1]
    adj = jnp.zeros((num_nodes, num_nodes), jnp.float32)
    adj = adj.at[dst, src].set(1.0)
    idx = jnp.arange(num_nodes)
    adj = adj.at[idx, idx].set(1.0)   # GATConv default add_self_loops=True
    return adj


def _scores_matrix(att_src, att_dst):
    """[H, F] attention vectors -> [H*F, 16] so (xp @ A)[:, h] / [:, 8 + h]
    give the per-head src / dst scores."""
    h_n, f_n = att_src.shape
    a = jnp.zeros((h_n * f_n, _SCORE_COLS), jnp.float32)
    for h in range(h_n):
        a = a.at[h * f_n:(h + 1) * f_n, h].set(att_src[h])
        a = a.at[h * f_n:(h + 1) * f_n, _SCORE_COLS // 2 + h].set(att_dst[h])
    return a


def _glorot(key, shape):
    fan_in, fan_out = shape[0], shape[-1]
    limit = jnp.sqrt(6.0 / (fan_in + fan_out))
    return jax.random.uniform(key, shape, jnp.float32, -limit, limit)


def init_gat_model_params(key, in_channels, hidden_channels, out_channels, heads):
    ks = jax.random.split(key, 8)
    return dict(
        # conv1: GATConv(in, hidden, heads=heads, concat=True)
        w1=_glorot(ks[0], (in_channels, heads * hidden_channels)),
        att_src1=_glorot(ks[1], (heads, hidden_channels)),
        att_dst1=_glorot(ks[2], (heads, hidden_channels)),
        b1=jnp.zeros((1, heads * hidden_channels), jnp.float32),
        # conv2: GATConv(hidden*heads, out, heads=1, concat=False)
        w2=_glorot(ks[3], (heads * hidden_channels, out_channels)),
        att_src2=_glorot(ks[4], (1, out_channels)),
        att_dst2=_glorot(ks[5], (1, out_channels)),
        b2=jnp.zeros((1, out_channels), jnp.float32),
    )


def gat_model_forward(params, x, edge_index, edge_weight, *,
                      hidden_channels, out_channels, heads, negative_slope=0.2):
    # TODO(synk): edge_weight is unused — GATConv ignores edge_attr when edge_dim=None.
    del edge_weight
    assert heads <= _SCORE_COLS // 2
    n, f_in = x.shape
    hfh = heads * hidden_channels

    cdt = _softmax_dtype()
    vmem_cap = _vmem_capacity_bytes()

    # ---- dst-row tile size (generation-aware) --------------------------------
    n8 = _round_up(n, 8)
    elt = jnp.dtype(cdt).itemsize
    # live bytes per dst row in an attention tile: bf16 mask row (double-buffered)
    # + ~3 softmax temporaries in the compute dtype.
    per_row = n8 * (2 * 2 + 3 * elt) + 1024
    budget = int(0.30 * vmem_cap)
    cand = max(16, (budget // per_row) // 16 * 16)
    if n8 <= 32:
        tile_m = n8
    else:
        tile_m = 16
        for t in (1024, 512, 256, 128, 64, 32, 16):
            if t <= min(cand, max(16, n8 // 2)):
                tile_m = t
                break
    n_pad = _round_up(n8, tile_m)
    num_tiles = n_pad // tile_m
    grid = (num_tiles,)

    # ---- dense additive mask in bf16 (halves the dominant O(N^2) transfer) ---
    adj = build_adjacency(edge_index, n)
    adj = jnp.pad(adj, ((0, n_pad - n), (0, n_pad - n)))
    mask_bias = jnp.where(adj > 0, 0.0, _NEG_BIG).astype(jnp.bfloat16)

    x_p = jnp.pad(x.astype(jnp.float32), ((0, n_pad - n), (0, 0)))
    w1, b1 = params["w1"], params["b1"]
    a1 = _scores_matrix(params["att_src1"], params["att_dst1"])   # [hfh, 16]
    w2, b2 = params["w2"], params["b2"]
    a2 = _scores_matrix(params["att_src2"], params["att_dst2"])   # [out, 16]

    def row_spec(width):
        return pl.BlockSpec((tile_m, width), lambda i: (i, 0))

    def whole_spec(shape):
        zeros = (0,) * len(shape)
        return pl.BlockSpec(shape, lambda i: zeros)

    compiler = pltpu.CompilerParams(
        dimension_semantics=("parallel",),      # megacore: shard dst-row tiles
        vmem_limit_bytes=int(min(0.85 * vmem_cap, 100 * 2 ** 20)))

    n2 = n_pad * n_pad

    # ---- kernel 1: layer-1 projection + per-head attention scores ------------
    xp1_bf, s1 = pl.pallas_call(
        _proj_kernel,
        grid=grid,
        in_specs=[row_spec(f_in), whole_spec(w1.shape), whole_spec(a1.shape)],
        out_specs=(row_spec(hfh), row_spec(_SCORE_COLS)),
        out_shape=(jax.ShapeDtypeStruct((n_pad, hfh), jnp.bfloat16),
                   jax.ShapeDtypeStruct((n_pad, _SCORE_COLS), jnp.float32)),
        compiler_params=compiler,
    )(x_p, w1, a1)

    # ---- kernel 2: layer-1 attention + ReLU, fused with layer-2 projection ---
    k2 = functools.partial(_attn_relu_proj_kernel, heads=heads, fo=hidden_channels,
                           negative_slope=negative_slope, compute_dtype=cdt)
    bytes2 = 2 * n2 + n_pad * (_SCORE_COLS * 12 + hfh * 2 + out_channels * 2)
    cost2 = pl.CostEstimate(
        flops=int(heads * (6 * n2 + 2 * n2 * hidden_channels)
                  + 2 * n_pad * hfh * out_channels),
        transcendentals=int(heads * n2),
        bytes_accessed=int(bytes2))
    xp2_bf, s2 = pl.pallas_call(
        k2,
        grid=grid,
        in_specs=[row_spec(n_pad),               # mask rows of this dst tile
                  row_spec(_SCORE_COLS),         # dst scores (this tile's rows)
                  whole_spec(s1.shape),          # src scores of ALL nodes
                  whole_spec(xp1_bf.shape),      # transformed source features
                  whole_spec(b1.shape),
                  whole_spec(w2.shape),
                  whole_spec(a2.shape)],
        out_specs=(row_spec(out_channels), row_spec(_SCORE_COLS)),
        out_shape=(jax.ShapeDtypeStruct((n_pad, out_channels), jnp.bfloat16),
                   jax.ShapeDtypeStruct((n_pad, _SCORE_COLS), jnp.float32)),
        compiler_params=compiler,
        cost_estimate=cost2,
    )(mask_bias, s1, s1, xp1_bf, b1, w2, a2)

    # ---- kernel 3: layer-2 attention + bias -----------------------------------
    k3 = functools.partial(_attn_out_kernel, heads=1, fo=out_channels,
                           negative_slope=negative_slope, compute_dtype=cdt)
    bytes3 = 2 * n2 + n_pad * (_SCORE_COLS * 12 + out_channels * 6)
    cost3 = pl.CostEstimate(
        flops=int(6 * n2 + 2 * n2 * out_channels),
        transcendentals=int(n2),
        bytes_accessed=int(bytes3))
    out = pl.pallas_call(
        k3,
        grid=grid,
        in_specs=[row_spec(n_pad),
                  row_spec(_SCORE_COLS),
                  whole_spec(s2.shape),
                  whole_spec(xp2_bf.shape),
                  whole_spec(b2.shape)],
        out_specs=row_spec(out_channels),
        out_shape=jax.ShapeDtypeStruct((n_pad, out_channels), jnp.float32),
        compiler_params=compiler,
        cost_estimate=cost3,
    )(mask_bias, s2, s2, xp2_bf, b2)

    return out[:n, :]


# ----------------------------------------------------------------------------
# pure-JAX reference & self-test
# ----------------------------------------------------------------------------
def _gat_reference(params, x, adj, *, hidden_channels, out_channels, heads,
                   negative_slope=0.2):
    """Pure-JAX f32 reference of the same GATModel forward."""
    def layer(xin, w, att_src, att_dst, b, n_heads, fo, concat):
        xp = xin @ w
        outs = []
        for h in range(n_heads):
            xh = xp[:, h * fo:(h + 1) * fo]
            s = xh @ att_src[h]
            d = xh @ att_dst[h]
            logits = d[:, None] + s[None, :]
            logits = jnp.where(logits >= 0, logits, negative_slope * logits)
            masked = jnp.where(adj > 0, logits, -jnp.inf)
            attn = jax.nn.softmax(masked, axis=1)
            attn = jnp.where(adj > 0, attn, 0.0)
            outs.append(attn @ xh)
        agg = jnp.concatenate(outs, axis=1) if concat else sum(outs) / n_heads
        return agg + b

    h1 = layer(x, params["w1"], params["att_src1"], params["att_dst1"],
               params["b1"], heads, hidden_channels, True)
    h1 = jnp.maximum(h1, 0.0)
    return layer(h1, params["w2"], params["att_src2"], params["att_dst2"],
                 params["b2"], 1, out_channels, False)


if __name__ == "__main__":
    N, IN_CH, HIDDEN, OUT_CH, HEADS = 8, 16, 8, 4, 4

    key = jax.random.PRNGKey(0)
    k_x, k_w, k_p = jax.random.split(key, 3)

    x = jax.random.normal(k_x, (N, IN_CH), jnp.float32)

    # Deterministic graph: directed ring in both directions (E = 16 edges).
    src = jnp.concatenate([jnp.arange(N), (jnp.arange(N) + 1) % N])
    dst = jnp.concatenate([(jnp.arange(N) + 1) % N, jnp.arange(N)])
    edge_index = jnp.stack([src, dst]).astype(jnp.int32)          # [2, 16]
    edge_weight = jax.random.uniform(k_w, (edge_index.shape[1],), jnp.float32)

    params = init_gat_model_params(k_p, IN_CH, HIDDEN, OUT_CH, HEADS)

    fwd = jax.jit(functools.partial(gat_model_forward, hidden_channels=HIDDEN,
                                    out_channels=OUT_CH, heads=HEADS))
    out = jax.block_until_ready(fwd(params, x, edge_index, edge_weight))

    assert out.shape == (N, OUT_CH) and out.dtype == jnp.float32
    assert bool(jnp.all(jnp.isfinite(out)))

    ref = _gat_reference(params, x, build_adjacency(edge_index, N),
                         hidden_channels=HIDDEN, out_channels=OUT_CH, heads=HEADS)
    max_err = float(jnp.max(jnp.abs(out - ref)))
    assert jnp.allclose(out, ref, rtol=5e-2, atol=5e-2), f"max abs err {max_err}"

    print("KERNEL_OK")
</pallas_src>

<mosaic_0001>
module attributes {stable_mosaic.version = 11 : i64} {
  func.func @_proj_kernel(%arg0: i32, %arg1: memref<8x16xf32, #tpu.memory_space<vmem>>, %arg2: memref<16x32xf32, #tpu.memory_space<vmem>>, %arg3: memref<32x16xf32, #tpu.memory_space<vmem>>, %arg4: memref<8x32xbf16, #tpu.memory_space<vmem>>, %arg5: memref<8x16xf32, #tpu.memory_space<vmem>>) attributes {dimension_semantics = [#tpu.dimension_semantics<parallel>], iteration_bounds = array<i64: 1>, scalar_prefetch = 0 : i64, scratch_operands = 0 : i64, tpu.core_type = #tpu.core_type<tc>, window_params = [{transform_indices = @transform_0, window_bounds = array<i64: 8, 16>}, {pipeline_mode = #tpu.pipeline_mode<synchronous>, transform_indices = @transform_1, window_bounds = array<i64: 16, 32>}, {pipeline_mode = #tpu.pipeline_mode<synchronous>, transform_indices = @transform_2, window_bounds = array<i64: 32, 16>}, {transform_indices = @transform_3, window_bounds = array<i64: 8, 32>}, {transform_indices = @transform_4, window_bounds = array<i64: 8, 16>}]} {
    %c0 = arith.constant 0 : index
    %c0_0 = arith.constant 0 : index
    %0 = vector.load %arg1[%c0, %c0_0] : memref<8x16xf32, #tpu.memory_space<vmem>>, vector<8x16xf32>
    %1 = arith.truncf %0 : vector<8x16xf32> to vector<8x16xbf16>
    %c0_1 = arith.constant 0 : index
    %c0_2 = arith.constant 0 : index
    %2 = vector.load %arg2[%c0_1, %c0_2] : memref<16x32xf32, #tpu.memory_space<vmem>>, vector<16x32xf32>
    %3 = arith.truncf %2 : vector<16x32xf32> to vector<16x32xbf16>
    %cst = arith.constant dense<0.000000e+00> : vector<8x32xf32>
    %4 = tpu.matmul %1, %3, %cst {dimension_numbers = #tpu.dot_dimension_numbers<[1], [0], [0], [1], [0, 0, 1, 1], [], []>} : vector<8x16xbf16>, vector<16x32xbf16>, vector<8x32xf32> -> vector<8x32xf32>
    %c0_3 = arith.constant 0 : index
    %c0_4 = arith.constant 0 : index
    %5 = vector.load %arg3[%c0_3, %c0_4] : memref<32x16xf32, #tpu.memory_space<vmem>>, vector<32x16xf32>
    %cst_5 = arith.constant dense<0.000000e+00> : vector<8x16xf32>
    %6 = tpu.matmul %4, %5, %cst_5 {dimension_numbers = #tpu.dot_dimension_numbers<[1], [0], [0], [1], [0, 0, 1, 1], [], []>} : vector<8x32xf32>, vector<32x16xf32>, vector<8x16xf32> -> vector<8x16xf32>
    %c0_6 = arith.constant 0 : index
    %c0_7 = arith.constant 0 : index
    %7 = vector.load %arg5[%c0_6, %c0_7] : memref<8x16xf32, #tpu.memory_space<vmem>>, vector<8x16xf32>
    tpu.vector_store %arg5[%c0_6, %c0_7], %6 {strides = array<i32>} : memref<8x16xf32, #tpu.memory_space<vmem>>, vector<8x16xf32>,
    %8 = arith.truncf %4 : vector<8x32xf32> to vector<8x32xbf16>
    %c0_8 = arith.constant 0 : index
    %c0_9 = arith.constant 0 : index
    %9 = vector.load %arg4[%c0_8, %c0_9] : memref<8x32xbf16, #tpu.memory_space<vmem>>, vector<8x32xbf16>
    tpu.vector_store %arg4[%c0_8, %c0_9], %8 {strides = array<i32>} : memref<8x32xbf16, #tpu.memory_space<vmem>>, vector<8x32xbf16>,
    return
  }
  func.func @transform_0(%arg0: i32) -> (i32, i32) {
    %c0_i32 = arith.constant 0 : i32
    %c0_i32_0 = arith.constant 0 : i32
    return %arg0, %c0_i32 : i32, i32
  }
  func.func @transform_1(%arg0: i32) -> (i32, i32) {
    %c0_i32 = arith.constant 0 : i32
    %c0_i32_0 = arith.constant 0 : i32
    %c0_i32_1 = arith.constant 0 : i32
    return %c0_i32, %c0_i32_0 : i32, i32
  }
  func.func @transform_2(%arg0: i32) -> (i32, i32) {
    %c0_i32 = arith.constant 0 : i32
    %c0_i32_0 = arith.constant 0 : i32
    %c0_i32_1 = arith.constant 0 : i32
    return %c0_i32, %c0_i32_0 : i32, i32
  }
  func.func @transform_3(%arg0: i32) -> (i32, i32) {
    %c0_i32 = arith.constant 0 : i32
    %c0_i32_0 = arith.constant 0 : i32
    return %arg0, %c0_i32 : i32, i32
  }
  func.func @transform_4(%arg0: i32) -> (i32, i32) {
    %c0_i32 = arith.constant 0 : i32
    %c0_i32_0 = arith.constant 0 : i32
    return %arg0, %c0_i32 : i32, i32
  }
}

module attributes {stable_mosaic.version = 11 : i64} {
  func.func @_attn_relu_proj_kernel(%arg0: i32, %arg1: memref<8x8xbf16, #tpu.memory_space<vmem>>, %arg2: memref<8x16xf32, #tpu.memory_space<vmem>>, %arg3: memref<8x16xf32, #tpu.memory_space<vmem>>, %arg4: memref<8x32xbf16, #tpu.memory_space<vmem>>, %arg5: memref<1x32xf32, #tpu.memory_space<vmem>>, %arg6: memref<32x4xf32, #tpu.memory_space<vmem>>, %arg7: memref<4x16xf32, #tpu.memory_space<vmem>>, %arg8: memref<8x4xbf16, #tpu.memory_space<vmem>>, %arg9: memref<8x16xf32, #tpu.memory_space<vmem>>) attributes {dimension_semantics = [#tpu.dimension_semantics<parallel>], iteration_bounds = array<i64: 1>, scalar_prefetch = 0 : i64, scratch_operands = 0 : i64, tpu.core_type = #tpu.core_type<tc>, window_params = [{transform_indices = @transform_0, window_bounds = array<i64: 8, 8>}, {transform_indices = @transform_1, window_bounds = array<i64: 8, 16>}, {pipeline_mode = #tpu.pipeline_mode<synchronous>, transform_indices = @transform_2, window_bounds = array<i64: 8, 16>}, {pipeline_mode = #tpu.pipeline_mode<synchronous>, transform_indices = @transform_3, window_bounds = array<i64: 8, 32>}, {pipeline_mode = #tpu.pipeline_mode<synchronous>, transform_indices = @transform_4, window_bounds = array<i64: 1, 32>}, {pipeline_mode = #tpu.pipeline_mode<synchronous>, transform_indices = @transform_5, window_bounds = array<i64: 32, 4>}, {pipeline_mode = #tpu.pipeline_mode<synchronous>, transform_indices = @transform_6, window_bounds = array<i64: 4, 16>}, {transform_indices = @transform_7, window_bounds = array<i64: 8, 4>}, {transform_indices = @transform_8, window_bounds = array<i64: 8, 16>}]} {
    %c0 = arith.constant 0 : index
    %c0_0 = arith.constant 0 : index
    %0 = vector.load %arg1[%c0, %c0_0] : memref<8x8xbf16, #tpu.memory_space<vmem>>, vector<8x8xbf16>
    %1 = arith.extf %0 : vector<8x8xbf16> to vector<8x8xf32>
    %c0_1 = arith.constant 0 : index
    %c0_2 = arith.constant 0 : index
    %2 = vector.load %arg3[%c0_1, %c0_2] : memref<8x16xf32, #tpu.memory_space<vmem>>, vector<8x16xf32>
    %3 = tpu.transpose %2, [1, 0] : vector<8x16xf32> -> vector<16x8xf32>
    %c0_3 = arith.constant 0 : index
    %c0_4 = arith.constant 0 : index
    %4 = vector.load %arg2[%c0_3, %c0_4] : memref<8x16xf32, #tpu.memory_space<vmem>>, vector<8x16xf32>
    %c0_5 = arith.constant 0 : index
    %c0_6 = arith.constant 0 : index
    %5 = vector.load %arg4[%c0_5, %c0_6] : memref<8x32xbf16, #tpu.memory_space<vmem>>, vector<8x32xbf16>
    %6 = vector.extract_strided_slice %4 {offsets = [0, 8], sizes = [8, 1], strides = [1, 1]} : vector<8x16xf32> to vector<8x1xf32>
    %7 = vector.extract_strided_slice %3 {offsets = [0, 0], sizes = [1, 8], strides = [1, 1]} : vector<16x8xf32> to vector<1x8xf32>
    %8 = vector.broadcast %6 : vector<8x1xf32> to vector<8x8xf32>
    %9 = vector.broadcast %7 : vector<1x8xf32> to vector<8x8xf32>
    %10 = arith.addf %8, %9 : vector<8x8xf32>
    %cst = arith.constant 0.000000e+00 : f32
    %11 = vector.broadcast %cst : f32 to vector<8x8xf32>
    %12 = arith.cmpf oge, %10, %11 : vector<8x8xf32>
    %cst_7 = arith.constant 2.000000e-01 : f32
    %13 = vector.broadcast %cst_7 : f32 to vector<8x8xf32>
    %14 = arith.mulf %13, %10 : vector<8x8xf32>
    %15 = arith.select %12, %10, %14 : vector<8x8xi1>, vector<8x8xf32>
    %16 = arith.addf %15, %1 : vector<8x8xf32>
    %cst_8 = arith.constant dense<0xFF800000> : vector<8xf32>
    %17 = vector.multi_reduction <maximumf>, %16, %cst_8 [1] : vector<8x8xf32> to vector<8xf32>
    %18 = vector.shape_cast %17 : vector<8xf32> to vector<8x1xf32>
    %19 = vector.broadcast %18 : vector<8x1xf32> to vector<8x8xf32>
    %20 = arith.subf %16, %19 : vector<8x8xf32>
    %21 = math.exp %20 : vector<8x8xf32>
    %cst_9 = arith.constant dense<0.000000e+00> : vector<8xf32>
    %22 = vector.multi_reduction <add>, %21, %cst_9 [1] : vector<8x8xf32> to vector<8xf32>
    %23 = vector.shape_cast %22 : vector<8xf32> to vector<8x1xf32>
    %24 = tpu.reciprocal %23 {approx = true} : vector<8x1xf32> -> vector<8x1xf32>
    %25 = vector.extract_strided_slice %5 {offsets = [0, 0], sizes = [8, 8], strides = [1, 1]} : vector<8x32xbf16> to vector<8x8xbf16>
    %26 = arith.truncf %21 : vector<8x8xf32> to vector<8x8xbf16>
    %cst_10 = arith.constant dense<0.000000e+00> : vector<8x8xf32>
    %27 = tpu.matmul %26, %25, %cst_10 {dimension_numbers = #tpu.dot_dimension_numbers<[1], [0], [0], [1], [0, 0, 1, 1], [], []>} : vector<8x8xbf16>, vector<8x8xbf16>, vector<8x8xf32> -> vector<8x8xf32>
    %28 = vector.broadcast %24 : vector<8x1xf32> to vector<8x8xf32>
    %29 = arith.mulf %27, %28 : vector<8x8xf32>
    %30 = vector.extract_strided_slice %4 {offsets = [0, 9], sizes = [8, 1], strides = [1, 1]} : vector<8x16xf32> to vector<8x1xf32>
    %31 = vector.extract_strided_slice %3 {offsets = [1, 0], sizes = [1, 8], strides = [1, 1]} : vector<16x8xf32> to vector<1x8xf32>
    %32 = vector.broadcast %30 : vector<8x1xf32> to vector<8x8xf32>
    %33 = vector.broadcast %31 : vector<1x8xf32> to vector<8x8xf32>
    %34 = arith.addf %32, %33 : vector<8x8xf32>
    %cst_11 = arith.constant 0.000000e+00 : f32
    %35 = vector.broadcast %cst_11 : f32 to vector<8x8xf32>
    %36 = arith.cmpf oge, %34, %35 : vector<8x8xf32>
    %cst_12 = arith.constant 2.000000e-01 : f32
    %37 = vector.broadcast %cst_12 : f32 to vector<8x8xf32>
    %38 = arith.mulf %37, %34 : vector<8x8xf32>
    %39 = arith.select %36, %34, %38 : vector<8x8xi1>, vector<8x8xf32>
    %40 = arith.addf %39, %1 : vector<8x8xf32>
    %cst_13 = arith.constant dense<0xFF800000> : vector<8xf32>
    %41 = vector.multi_reduction <maximumf>, %40, %cst_13 [1] : vector<8x8xf32> to vector<8xf32>
    %42 = vector.shape_cast %41 : vector<8xf32> to vector<8x1xf32>
    %43 = vector.broadcast %42 : vector<8x1xf32> to vector<8x8xf32>
    %44 = arith.subf %40, %43 : vector<8x8xf32>
    %45 = math.exp %44 : vector<8x8xf32>
    %cst_14 = arith.constant dense<0.000000e+00> : vector<8xf32>
    %46 = vector.multi_reduction <add>, %45, %cst_14 [1] : vector<8x8xf32> to vector<8xf32>
    %47 = vector.shape_cast %46 : vector<8xf32> to vector<8x1xf32>
    %48 = tpu.reciprocal %47 {approx = true} : vector<8x1xf32> -> vector<8x1xf32>
    %49 = vector.extract_strided_slice %5 {offsets = [0, 8], sizes = [8, 8], strides = [1, 1]} : vector<8x32xbf16> to vector<8x8xbf16>
    %50 = arith.truncf %45 : vector<8x8xf32> to vector<8x8xbf16>
    %cst_15 = arith.constant dense<0.000000e+00> : vector<8x8xf32>
    %51 = tpu.matmul %50, %49, %cst_15 {dimension_numbers = #tpu.dot_dimension_numbers<[1], [0], [0], [1], [0, 0, 1, 1], [], []>} : vector<8x8xbf16>, vector<8x8xbf16>, vector<8x8xf32> -> vector<8x8xf32>
    %52 = vector.broadcast %48 : vector<8x1xf32> to vector<8x8xf32>
    %53 = arith.mulf %51, %52 : vector<8x8xf32>
    %54 = vector.extract_strided_slice %4 {offsets = [0, 10], sizes = [8, 1], strides = [1, 1]} : vector<8x16xf32> to vector<8x1xf32>
    %55 = vector.extract_strided_slice %3 {offsets = [2, 0], sizes = [1, 8], strides = [1, 1]} : vector<16x8xf32> to vector<1x8xf32>
    %56 = vector.broadcast %54 : vector<8x1xf32> to vector<8x8xf32>
    %57 = vector.broadcast %55 : vector<1x8xf32> to vector<8x8xf32>
    %58 = arith.addf %56, %57 : vector<8x8xf32>
    %cst_16 = arith.constant 0.000000e+00 : f32
    %59 = vector.broadcast %cst_16 : f32 to vector<8x8xf32>
    %60 = arith.cmpf oge, %58, %59 : vector<8x8xf32>
    %cst_17 = arith.constant 2.000000e-01 : f32
    %61 = vector.broadcast %cst_17 : f32 to vector<8x8xf32>
    %62 = arith.mulf %61, %58 : vector<8x8xf32>
    %63 = arith.select %60, %58, %62 : vector<8x8xi1>, vector<8x8xf32>
    %64 = arith.addf %63, %1 : vector<8x8xf32>
    %cst_18 = arith.constant dense<0xFF800000> : vector<8xf32>
    %65 = vector.multi_reduction <maximumf>, %64, %cst_18 [1] : vector<8x8xf32> to vector<8xf32>
    %66 = vector.shape_cast %65 : vector<8xf32> to vector<8x1xf32>
    %67 = vector.broadcast %66 : vector<8x1xf32> to vector<8x8xf32>
    %68 = arith.subf %64, %67 : vector<8x8xf32>
    %69 = math.exp %68 : vector<8x8xf32>
    %cst_19 = arith.constant dense<0.000000e+00> : vector<8xf32>
    %70 = vector.multi_reduction <add>, %69, %cst_19 [1] : vector<8x8xf32> to vector<8xf32>
    %71 = vector.shape_cast %70 : vector<8xf32> to vector<8x1xf32>
    %72 = tpu.reciprocal %71 {approx = true} : vector<8x1xf32> -> vector<8x1xf32>
    %73 = vector.extract_strided_slice %5 {offsets = [0, 16], sizes = [8, 8], strides = [1, 1]} : vector<8x32xbf16> to vector<8x8xbf16>
    %74 = arith.truncf %69 : vector<8x8xf32> to vector<8x8xbf16>
    %cst_20 = arith.constant dense<0.000000e+00> : vector<8x8xf32>
    %75 = tpu.matmul %74, %73, %cst_20 {dimension_numbers = #tpu.dot_dimension_numbers<[1], [0], [0], [1], [0, 0, 1, 1], [], []>} : vector<8x8xbf16>, vector<8x8xbf16>, vector<8x8xf32> -> vector<8x8xf32>
    %76 = vector.broadcast %72 : vector<8x1xf32> to vector<8x8xf32>
    %77 = arith.mulf %75, %76 : vector<8x8xf32>
    %78 = vector.extract_strided_slice %4 {offsets = [0, 11], sizes = [8, 1], strides = [1, 1]} : vector<8x16xf32> to vector<8x1xf32>
    %79 = vector.extract_strided_slice %3 {offsets = [3, 0], sizes = [1, 8], strides = [1, 1]} : vector<16x8xf32> to vector<1x8xf32>
    %80 = vector.broadcast %78 : vector<8x1xf32> to vector<8x8xf32>
    %81 = vector.broadcast %79 : vector<1x8xf32> to vector<8x8xf32>
    %82 = arith.addf %80, %81 : vector<8x8xf32>
    %cst_21 = arith.constant 0.000000e+00 : f32
    %83 = vector.broadcast %cst_21 : f32 to vector<8x8xf32>
    %84 = arith.cmpf oge, %82, %83 : vector<8x8xf32>
    %cst_22 = arith.constant 2.000000e-01 : f32
    %85 = vector.broadcast %cst_22 : f32 to vector<8x8xf32>
    %86 = arith.mulf %85, %82 : vector<8x8xf32>
    %87 = arith.select %84, %82, %86 : vector<8x8xi1>, vector<8x8xf32>
    %88 = arith.addf %87, %1 : vector<8x8xf32>
    %cst_23 = arith.constant dense<0xFF800000> : vector<8xf32>
    %89 = vector.multi_reduction <maximumf>, %88, %cst_23 [1] : vector<8x8xf32> to vector<8xf32>
    %90 = vector.shape_cast %89 : vector<8xf32> to vector<8x1xf32>
    %91 = vector.broadcast %90 : vector<8x1xf32> to vector<8x8xf32>
    %92 = arith.subf %88, %91 : vector<8x8xf32>
    %93 = math.exp %92 : vector<8x8xf32>
    %cst_24 = arith.constant dense<0.000000e+00> : vector<8xf32>
    %94 = vector.multi_reduction <add>, %93, %cst_24 [1] : vector<8x8xf32> to vector<8xf32>
    %95 = vector.shape_cast %94 : vector<8xf32> to vector<8x1xf32>
    %96 = tpu.reciprocal %95 {approx = true} : vector<8x1xf32> -> vector<8x1xf32>
    %97 = vector.extract_strided_slice %5 {offsets = [0, 24], sizes = [8, 8], strides = [1, 1]} : vector<8x32xbf16> to vector<8x8xbf16>
    %98 = arith.truncf %93 : vector<8x8xf32> to vector<8x8xbf16>
    %cst_25 = arith.constant dense<0.000000e+00> : vector<8x8xf32>
    %99 = tpu.matmul %98, %97, %cst_25 {dimension_numbers = #tpu.dot_dimension_numbers<[1], [0], [0], [1], [0, 0, 1, 1], [], []>} : vector<8x8xbf16>, vector<8x8xbf16>, vector<8x8xf32> -> vector<8x8xf32>
    %100 = vector.broadcast %96 : vector<8x1xf32> to vector<8x8xf32>
    %101 = arith.mulf %99, %100 : vector<8x8xf32>
    %102 = tpu.concatenate %29, %53, %77, %101 in 1 : vector<8x8xf32>, vector<8x8xf32>, vector<8x8xf32>, vector<8x8xf32> -> vector<8x32xf32>
    %c0_26 = arith.constant 0 : index
    %c0_27 = arith.constant 0 : index
    %103 = vector.load %arg5[%c0_26, %c0_27] : memref<1x32xf32, #tpu.memory_space<vmem>>, vector<1x32xf32>
    %104 = vector.broadcast %103 : vector<1x32xf32> to vector<8x32xf32>
    %105 = arith.addf %102, %104 : vector<8x32xf32>
    %cst_28 = arith.constant 0.000000e+00 : f32
    %106 = vector.broadcast %cst_28 : f32 to vector<8x32xf32>
    %107 = arith.maximumf %105, %106 : vector<8x32xf32>
    %108 = arith.truncf %107 : vector<8x32xf32> to vector<8x32xbf16>
    %c0_29 = arith.constant 0 : index
    %c0_30 = arith.constant 0 : index
    %109 = vector.load %arg6[%c0_29, %c0_30] : memref<32x4xf32, #tpu.memory_space<vmem>>, vector<32x4xf32>
    %110 = arith.truncf %109 : vector<32x4xf32> to vector<32x4xbf16>
    %cst_31 = arith.constant dense<0.000000e+00> : vector<8x4xf32>
    %111 = tpu.matmul %108, %110, %cst_31 {dimension_numbers = #tpu.dot_dimension_numbers<[1], [0], [0], [1], [0, 0, 1, 1], [], []>} : vector<8x32xbf16>, vector<32x4xbf16>, vector<8x4xf32> -> vector<8x4xf32>
    %c0_32 = arith.constant 0 : index
    %c0_33 = arith.constant 0 : index
    %112 = vector.load %arg7[%c0_32, %c0_33] : memref<4x16xf32, #tpu.memory_space<vmem>>, vector<4x16xf32>
    %cst_34 = arith.constant dense<0.000000e+00> : vector<8x16xf32>
    %113 = tpu.matmul %111, %112, %cst_34 {dimension_numbers = #tpu.dot_dimension_numbers<[1], [0], [0], [1], [0, 0, 1, 1], [], []>} : vector<8x4xf32>, vector<4x16xf32>, vector<8x16xf32> -> vector<8x16xf32>
    %c0_35 = arith.constant 0 : index
    %c0_36 = arith.constant 0 : index
    %114 = vector.load %arg9[%c0_35, %c0_36] : memref<8x16xf32, #tpu.memory_space<vmem>>, vector<8x16xf32>
    tpu.vector_store %arg9[%c0_35, %c0_36], %113 {strides = array<i32>} : memref<8x16xf32, #tpu.memory_space<vmem>>, vector<8x16xf32>,
    %115 = arith.truncf %111 : vector<8x4xf32> to vector<8x4xbf16>
    %c0_37 = arith.constant 0 : index
    %c0_38 = arith.constant 0 : index
    %116 = vector.load %arg8[%c0_37, %c0_38] : memref<8x4xbf16, #tpu.memory_space<vmem>>, vector<8x4xbf16>
    tpu.vector_store %arg8[%c0_37, %c0_38], %115 {strides = array<i32>} : memref<8x4xbf16, #tpu.memory_space<vmem>>, vector<8x4xbf16>,
    return
  }
  func.func @transform_0(%arg0: i32) -> (i32, i32) {
    %c0_i32 = arith.constant 0 : i32
    %c0_i32_0 = arith.constant 0 : i32
    return %arg0, %c0_i32 : i32, i32
  }
  func.func @transform_1(%arg0: i32) -> (i32, i32) {
    %c0_i32 = arith.constant 0 : i32
    %c0_i32_0 = arith.constant 0 : i32
    return %arg0, %c0_i32 : i32, i32
  }
  func.func @transform_2(%arg0: i32) -> (i32, i32) {
    %c0_i32 = arith.constant 0 : i32
    %c0_i32_0 = arith.constant 0 : i32
    %c0_i32_1 = arith.constant 0 : i32
    return %c0_i32, %c0_i32_0 : i32, i32
  }
  func.func @transform_3(%arg0: i32) -> (i32, i32) {
    %c0_i32 = arith.constant 0 : i32
    %c0_i32_0 = arith.constant 0 : i32
    %c0_i32_1 = arith.constant 0 : i32
    return %c0_i32, %c0_i32_0 : i32, i32
  }
  func.func @transform_4(%arg0: i32) -> (i32, i32) {
    %c0_i32 = arith.constant 0 : i32
    %c0_i32_0 = arith.constant 0 : i32
    %c0_i32_1 = arith.constant 0 : i32
    return %c0_i32, %c0_i32_0 : i32, i32
  }
  func.func @transform_5(%arg0: i32) -> (i32, i32) {
    %c0_i32 = arith.constant 0 : i32
    %c0_i32_0 = arith.constant 0 : i32
    %c0_i32_1 = arith.constant 0 : i32
    return %c0_i32, %c0_i32_0 : i32, i32
  }
  func.func @transform_6(%arg0: i32) -> (i32, i32) {
    %c0_i32 = arith.constant 0 : i32
    %c0_i32_0 = arith.constant 0 : i32
    %c0_i32_1 = arith.constant 0 : i32
    return %c0_i32, %c0_i32_0 : i32, i32
  }
  func.func @transform_7(%arg0: i32) -> (i32, i32) {
    %c0_i32 = arith.constant 0 : i32
    %c0_i32_0 = arith.constant 0 : i32
    return %arg0, %c0_i32 : i32, i32
  }
  func.func @transform_8(%arg0: i32) -> (i32, i32) {
    %c0_i32 = arith.constant 0 : i32
    %c0_i32_0 = arith.constant 0 : i32
    return %arg0, %c0_i32 : i32, i32
  }
}

module attributes {stable_mosaic.version = 11 : i64} {
  func.func @_attn_out_kernel(%arg0: i32, %arg1: memref<8x8xbf16, #tpu.memory_space<vmem>>, %arg2: memref<8x16xf32, #tpu.memory_space<vmem>>, %arg3: memref<8x16xf32, #tpu.memory_space<vmem>>, %arg4: memref<8x4xbf16, #tpu.memory_space<vmem>>, %arg5: memref<1x4xf32, #tpu.memory_space<vmem>>, %arg6: memref<8x4xf32, #tpu.memory_space<vmem>>) attributes {dimension_semantics = [#tpu.dimension_semantics<parallel>], iteration_bounds = array<i64: 1>, scalar_prefetch = 0 : i64, scratch_operands = 0 : i64, tpu.core_type = #tpu.core_type<tc>, window_params = [{transform_indices = @transform_0, window_bounds = array<i64: 8, 8>}, {transform_indices = @transform_1, window_bounds = array<i64: 8, 16>}, {pipeline_mode = #tpu.pipeline_mode<synchronous>, transform_indices = @transform_2, window_bounds = array<i64: 8, 16>}, {pipeline_mode = #tpu.pipeline_mode<synchronous>, transform_indices = @transform_3, window_bounds = array<i64: 8, 4>}, {pipeline_mode = #tpu.pipeline_mode<synchronous>, transform_indices = @transform_4, window_bounds = array<i64: 1, 4>}, {transform_indices = @transform_5, window_bounds = array<i64: 8, 4>}]} {
    %c0 = arith.constant 0 : index
    %c0_0 = arith.constant 0 : index
    %0 = vector.load %arg1[%c0, %c0_0] : memref<8x8xbf16, #tpu.memory_space<vmem>>, vector<8x8xbf16>
    %1 = arith.extf %0 : vector<8x8xbf16> to vector<8x8xf32>
    %c0_1 = arith.constant 0 : index
    %c0_2 = arith.constant 0 : index
    %2 = vector.load %arg3[%c0_1, %c0_2] : memref<8x16xf32, #tpu.memory_space<vmem>>, vector<8x16xf32>
    %3 = tpu.transpose %2, [1, 0] : vector<8x16xf32> -> vector<16x8xf32>
    %c0_3 = arith.constant 0 : index
    %c0_4 = arith.constant 0 : index
    %4 = vector.load %arg2[%c0_3, %c0_4] : memref<8x16xf32, #tpu.memory_space<vmem>>, vector<8x16xf32>
    %c0_5 = arith.constant 0 : index
    %c0_6 = arith.constant 0 : index
    %5 = vector.load %arg4[%c0_5, %c0_6] : memref<8x4xbf16, #tpu.memory_space<vmem>>, vector<8x4xbf16>
    %6 = vector.extract_strided_slice %4 {offsets = [0, 8], sizes = [8, 1], strides = [1, 1]} : vector<8x16xf32> to vector<8x1xf32>
    %7 = vector.extract_strided_slice %3 {offsets = [0, 0], sizes = [1, 8], strides = [1, 1]} : vector<16x8xf32> to vector<1x8xf32>
    %8 = vector.broadcast %6 : vector<8x1xf32> to vector<8x8xf32>
    %9 = vector.broadcast %7 : vector<1x8xf32> to vector<8x8xf32>
    %10 = arith.addf %8, %9 : vector<8x8xf32>
    %cst = arith.constant 0.000000e+00 : f32
    %11 = vector.broadcast %cst : f32 to vector<8x8xf32>
    %12 = arith.cmpf oge, %10, %11 : vector<8x8xf32>
    %cst_7 = arith.constant 2.000000e-01 : f32
    %13 = vector.broadcast %cst_7 : f32 to vector<8x8xf32>
    %14 = arith.mulf %13, %10 : vector<8x8xf32>
    %15 = arith.select %12, %10, %14 : vector<8x8xi1>, vector<8x8xf32>
    %16 = arith.addf %15, %1 : vector<8x8xf32>
    %cst_8 = arith.constant dense<0xFF800000> : vector<8xf32>
    %17 = vector.multi_reduction <maximumf>, %16, %cst_8 [1] : vector<8x8xf32> to vector<8xf32>
    %18 = vector.shape_cast %17 : vector<8xf32> to vector<8x1xf32>
    %19 = vector.broadcast %18 : vector<8x1xf32> to vector<8x8xf32>
    %20 = arith.subf %16, %19 : vector<8x8xf32>
    %21 = math.exp %20 : vector<8x8xf32>
    %cst_9 = arith.constant dense<0.000000e+00> : vector<8xf32>
    %22 = vector.multi_reduction <add>, %21, %cst_9 [1] : vector<8x8xf32> to vector<8xf32>
    %23 = vector.shape_cast %22 : vector<8xf32> to vector<8x1xf32>
    %24 = tpu.reciprocal %23 {approx = true} : vector<8x1xf32> -> vector<8x1xf32>
    %25 = arith.truncf %21 : vector<8x8xf32> to vector<8x8xbf16>
    %cst_10 = arith.constant dense<0.000000e+00> : vector<8x4xf32>
    %26 = tpu.matmul %25, %5, %cst_10 {dimension_numbers = #tpu.dot_dimension_numbers<[1], [0], [0], [1], [0, 0, 1, 1], [], []>} : vector<8x8xbf16>, vector<8x4xbf16>, vector<8x4xf32> -> vector<8x4xf32>
    %27 = vector.broadcast %24 : vector<8x1xf32> to vector<8x4xf32>
    %28 = arith.mulf %26, %27 : vector<8x4xf32>
    %c0_11 = arith.constant 0 : index
    %c0_12 = arith.constant 0 : index
    %29 = vector.load %arg5[%c0_11, %c0_12] : memref<1x4xf32, #tpu.memory_space<vmem>>, vector<1x4xf32>
    %30 = vector.broadcast %29 : vector<1x4xf32> to vector<8x4xf32>
    %31 = arith.addf %28, %30 : vector<8x4xf32>
    %c0_13 = arith.constant 0 : index
    %c0_14 = arith.constant 0 : index
    %32 = vector.load %arg6[%c0_13, %c0_14] : memref<8x4xf32, #tpu.memory_space<vmem>>, vector<8x4xf32>
    tpu.vector_store %arg6[%c0_13, %c0_14], %31 {strides = array<i32>} : memref<8x4xf32, #tpu.memory_space<vmem>>, vector<8x4xf32>,
    return
  }
  func.func @transform_0(%arg0: i32) -> (i32, i32) {
    %c0_i32 = arith.constant 0 : i32
    %c0_i32_0 = arith.constant 0 : i32
    return %arg0, %c0_i32 : i32, i32
  }
  func.func @transform_1(%arg0: i32) -> (i32, i32) {
    %c0_i32 = arith.constant 0 : i32
    %c0_i32_0 = arith.constant 0 : i32
    return %arg0, %c0_i32 : i32, i32
  }
  func.func @transform_2(%arg0: i32) -> (i32, i32) {
    %c0_i32 = arith.constant 0 : i32
    %c0_i32_0 = arith.constant 0 : i32
    %c0_i32_1 = arith.constant 0 : i32
    return %c0_i32, %c0_i32_0 : i32, i32
  }
  func.func @transform_3(%arg0: i32) -> (i32, i32) {
    %c0_i32 = arith.constant 0 : i32
    %c0_i32_0 = arith.constant 0 : i32
    %c0_i32_1 = arith.constant 0 : i32
    return %c0_i32, %c0_i32_0 : i32, i32
  }
  func.func @transform_4(%arg0: i32) -> (i32, i32) {
    %c0_i32 = arith.constant 0 : i32
    %c0_i32_0 = arith.constant 0 : i32
    %c0_i32_1 = arith.constant 0 : i32
    return %c0_i32, %c0_i32_0 : i32, i32
  }
  func.func @transform_5(%arg0: i32) -> (i32, i32) {
    %c0_i32 = arith.constant 0 : i32
    %c0_i32_0 = arith.constant 0 : i32
    return %arg0, %c0_i32 : i32, i32
  }
}

</mosaic_0001>

<llo_original>
// kernel: gat_model_forward.3
$region0: #{gat_model_forward.3}
  #allocation0 [shape = 'u32[]', space=smem, size = 0x4, offset = 0x4, fixed_abs, tag = 'smem constant byte address 0x4 - core index']
  #allocation1 [shape = 'u32[144,128]{1,0:T(1,128)}', space=vmem, size = 0x12000, scoped, tag = 'internal scratch']
  %s0 = inlined_call_operand.vmem [shape: f32[8,16], index: 0, kind: input, shape index: {}]
  %s1 = inlined_call_operand.vmem [shape: f32[16,32], index: 1, kind: input, shape index: {}]
  %s2 = inlined_call_operand.vmem [shape: f32[32,16], index: 2, kind: input, shape index: {}]
  %s3 = inlined_call_operand.vmem [shape: bf16[8,32], index: 3, kind: output, shape index: {0}]
  %s4 = inlined_call_operand.vmem [shape: f32[8,16], index: 4, kind: output, shape index: {1}]
  %5 = xla_tuple %s3, %s4
  %s6 = sld [smem:[#allocation0]]
  $region30: #{gat_model_forward.3} parent=0
    _
  %s8 = ssub.s32 1, %s6
  %s9 = scalar_select 0, %s8, %s6
  // Predicated region
  $region2: #{gat_model_forward.3} parent=0 // pred_check
    _
  $region3: #{gat_model_forward.3} parent=0 // pred_check_branch
    %11 = sbr.rel (0) target = $region5
  $region4: #{gat_model_forward.3} parent=0 // pred_region
    _
  $region5: #{gat_model_forward.3} parent=0 // pred_fallthru
    _
  // Predicated region
  $region6: #{gat_model_forward.3} parent=0 // pred_check
    _
  $region7: #{gat_model_forward.3} parent=0 // pred_check_branch
    %13 = sbr.rel (0) target = $region9
  $region8: #{gat_model_forward.3} parent=0 // pred_region
    _
  $region9: #{gat_model_forward.3} parent=0 // pred_fallthru
    _
  // Predicated region
  $region10: #{gat_model_forward.3} parent=0 // pred_check
    _
  $region11: #{gat_model_forward.3} parent=0 // pred_check_branch
    %15 = sbr.rel (0) target = $region13
  $region12: #{gat_model_forward.3} parent=0 // pred_region
    _
  $region13: #{gat_model_forward.3} parent=0 // pred_fallthru
    _
  %v17 = vld [vmem:[%s0] sm:$0xff]
  %v18 = vpack.c.bf16 %v17, %v17
  %v19 = vld [vmem:[%s1] sm:$0xff]
  %v20 = vld [vmem:[%s1 + $0x8] sm:$0xff]
  %v21 = vpack.c.bf16 %v20, %v19
  %vm22 = vcmask 130048
  %v24 = vsel %vm22, %v18, 0
  %26 = vmatprep.subr.bf16.mxu0 0
  %27 = vmatpush1.bf16.msra.mxu0 %v21
  %28 = vmatprep.subr.bf16.mxu0 0
  %29 = vmatpush1.bf16.msra.mxu0 0
  %30 = vmatprep.subr.bf16.mxu0 0
  %31 = vmatpush1.bf16.msra.mxu0 0
  %32 = vmatprep.subr.bf16.mxu0 0
  %33 = vmatpush1.bf16.msra.mxu0 0
  %34 = vmatprep.subr.bf16.mxu0 0
  %35 = vmatpush1.bf16.msra.mxu0 0
  %36 = vmatprep.subr.bf16.mxu0 0
  %37 = vmatpush1.bf16.msra.mxu0 0
  %38 = vmatprep.subr.bf16.mxu0 0
  %39 = vmatpush1.bf16.msra.mxu0 0
  %40 = vmatprep.subr.bf16.mxu0 0
  %41 = vmatpush1.bf16.msra.mxu0 0
  %42 = vmatprep.subr.bf16.mxu0 0
  %43 = vmatpush1.bf16.msra.mxu0 0
  %44 = vmatprep.subr.bf16.mxu0 0
  %45 = vmatpush1.bf16.msra.mxu0 0
  %46 = vmatprep.subr.bf16.mxu0 0
  %47 = vmatpush1.bf16.msra.mxu0 0
  %48 = vmatprep.subr.bf16.mxu0 0
  %49 = vmatpush1.bf16.msra.mxu0 0
  %50 = vmatprep.subr.bf16.mxu0 0
  %51 = vmatpush1.bf16.msra.mxu0 0
  %52 = vmatprep.subr.bf16.mxu0 0
  %53 = vmatpush1.bf16.msra.mxu0 0
  %54 = vmatprep.subr.bf16.mxu0 0
  %55 = vmatpush1.bf16.msra.mxu0 0
  %56 = vmatprep.subr.bf16.mxu0 0
  %57 = vmatpush1.bf16.msra.mxu0 0
  %58 = vmatprep.mubr.bf16.mxu0 0
  %59 = vmatmul.mubr.bf16.gmra.mrb[0].mxu0 %v24
  %v60 = vpop.f32.mrb[0].mxu0
  %v61 = vadd.f32 0.0, %v60
  %v62 = vpop.f32.mrb[0].mxu0
  %v63 = vpop.f32.mrb[0].mxu0
  %v64 = vpop.f32.mrb[0].mxu0
  %65 = vdwg.mxu0
  %v66 = vld [vmem:[%s2] sm:$0xff]
  %v67 = vld [vmem:[%s2 + $0x8] sm:$0xff]
  %v68 = vld [vmem:[%s2 + $0x10] sm:$0xff]
  %v69 = vld [vmem:[%s2 + $0x18] sm:$0xff]
  %vm70 = vcmask 261120
  %v72 = vsel %vm70, %v61, 0
  %74 = vmatprep.subr.mxu0 0.0
  %75 = vmatpush1.msra.mxu0 %v66
  %76 = vmatprep.subr.mxu0 0.0
  %77 = vmatpush1.msra.mxu0 %v67
  %78 = vmatprep.subr.mxu0 0.0
  %79 = vmatpush1.msra.mxu0 %v68
  %80 = vmatprep.subr.mxu0 0.0
  %81 = vmatpush1.msra.mxu0 %v69
  %82 = vmatprep.subr.mxu0 0.0
  %83 = vmatpush1.msra.mxu0 0.0
  %84 = vmatprep.subr.mxu0 0.0
  %85 = vmatpush1.msra.mxu0 0.0
  %86 = vmatprep.subr.mxu0 0.0
  %87 = vmatpush1.msra.mxu0 0.0
  %88 = vmatprep.subr.mxu0 0.0
  %89 = vmatpush1.msra.mxu0 0.0
  %90 = vmatprep.subr.mxu0 0.0
  %91 = vmatpush1.msra.mxu0 0.0
  %92 = vmatprep.subr.mxu0 0.0
  %93 = vmatpush1.msra.mxu0 0.0
  %94 = vmatprep.subr.mxu0 0.0
  %95 = vmatpush1.msra.mxu0 0.0
  %96 = vmatprep.subr.mxu0 0.0
  %97 = vmatpush1.msra.mxu0 0.0
  %98 = vmatprep.subr.mxu0 0.0
  %99 = vmatpush1.msra.mxu0 0.0
  %100 = vmatprep.subr.mxu0 0.0
  %101 = vmatpush1.msra.mxu0 0.0
  %102 = vmatprep.subr.mxu0 0.0
  %103 = vmatpush1.msra.mxu0 0.0
  %104 = vmatprep.subr.mxu0 0.0
  %105 = vmatpush1.msra.mxu0 0.0
  %106 = vmatprep.subr.mxu0 0.0
  %107 = vmatpush1.msra.mxu0 0.0
  %108 = vmatprep.subr.mxu0 0.0
  %109 = vmatpush1.msra.mxu0 0.0
  %110 = vmatprep.subr.mxu0 0.0
  %111 = vmatpush1.msra.mxu0 0.0
  %112 = vmatprep.subr.mxu0 0.0
  %113 = vmatpush1.msra.mxu0 0.0
  %114 = vmatprep.subr.mxu0 0.0
  %115 = vmatpush1.msra.mxu0 0.0
  %116 = vmatprep.subr.mxu0 0.0
  %117 = vmatpush1.msra.mxu0 0.0
  %118 = vmatprep.subr.mxu0 0.0
  %119 = vmatpush1.msra.mxu0 0.0
  %120 = vmatprep.subr.mxu0 0.0
  %121 = vmatpush1.msra.mxu0 0.0
  %122 = vmatprep.subr.mxu0 0.0
  %123 = vmatpush1.msra.mxu0 0.0
  %124 = vmatprep.subr.mxu0 0.0
  %125 = vmatpush1.msra.mxu0 0.0
  %126 = vmatprep.subr.mxu0 0.0
  %127 = vmatpush1.msra.mxu0 0.0
  %128 = vmatprep.subr.mxu0 0.0
  %129 = vmatpush1.msra.mxu0 0.0
  %130 = vmatprep.subr.mxu0 0.0
  %131 = vmatpush1.msra.mxu0 0.0
  %132 = vmatprep.subr.mxu0 0.0
  %133 = vmatpush1.msra.mxu0 0.0
  %134 = vmatprep.subr.mxu0 0.0
  %135 = vmatpush1.msra.mxu0 0.0
  %136 = vmatprep.subr.mxu0 0.0
  %137 = vmatpush1.msra.mxu0 0.0
  %138 = vmatprep.mubr.f32.mxu0 0.0
  %139 = vmatmul.mubr.f32.gmra.mrb[0].mxu0 %v72
  %v140 = vpop.f32.mrb[0].mxu0
  %v141 = vadd.f32 0.0, %v140
  %v142 = vpop.f32.mrb[0].mxu0
  %143 = vdwg.mxu0
  %144 = vst.msk [vmem:[%s4] sm:$0xff] %vm22, %v141
  %v145 = vpack.c.bf16 %v61, %v61
  %vm146 = vcmask 257024
  %147 = vst.msk [vmem:[%s3] sm:$0xf] %vm146, %v145
  // Predicated region
  $region14: #{gat_model_forward.3} parent=0 // pred_check
    _
  $region15: #{gat_model_forward.3} parent=0 // pred_check_branch
    %149 = sbr.rel (0) target = $region17
  $region16: #{gat_model_forward.3} parent=0 // pred_region
    _
  $region17: #{gat_model_forward.3} parent=0 // pred_fallthru
    _
  // Predicated region
  $region18: #{gat_model_forward.3} parent=0 // pred_check
    _
  $region19: #{gat_model_forward.3} parent=0 // pred_check_branch
    %151 = sbr.rel (0) target = $region21
  $region20: #{gat_model_forward.3} parent=0 // pred_region
    _
  $region21: #{gat_model_forward.3} parent=0 // pred_fallthru
    _
  // Predicated region
  $region22: #{gat_model_forward.3} parent=0 // pred_check
    _
  $region23: #{gat_model_forward.3} parent=0 // pred_check_branch
    %153 = sbr.rel (0) target = $region25
  $region24: #{gat_model_forward.3} parent=0 // pred_region
    _
  $region25: #{gat_model_forward.3} parent=0 // pred_fallthru
    _
  // Predicated region
  $region26: #{gat_model_forward.3} parent=0 // pred_check
    _
  $region27: #{gat_model_forward.3} parent=0 // pred_check_branch
    %155 = sbr.rel (0) target = $region29
  $region28: #{gat_model_forward.3} parent=0 // pred_region
    _
  $region29: #{gat_model_forward.3} parent=0 // pred_fallthru
    _

// kernel: gat_model_forward.5
$region0: #{gat_model_forward.5}
  #allocation0 [shape = 'u32[]', space=smem, size = 0x4, offset = 0x4, fixed_abs, tag = 'smem constant byte address 0x4 - core index']
  #allocation1 [shape = 'u32[144,128]{1,0:T(1,128)}', space=vmem, size = 0x12000, scoped, tag = 'internal scratch']
  %s0 = inlined_call_operand.vmem [shape: bf16[8,8], index: 0, kind: input, shape index: {}]
  %s1 = inlined_call_operand.vmem [shape: f32[8,16], index: 1, kind: input, shape index: {}, may-alias: {1,2}]
  %s2 = inlined_call_operand.vmem [shape: f32[8,16], index: 2, kind: input, shape index: {}, may-alias: {1,2}]
  %s3 = inlined_call_operand.vmem [shape: bf16[8,4], index: 3, kind: input, shape index: {}]
  %s4 = inlined_call_operand.vmem [shape: f32[1,4], index: 4, kind: input, shape index: {}]
  %s5 = inlined_call_operand.vmem [shape: f32[8,4], index: 5, kind: output, shape index: {}]
  %s6 = sld [smem:[#allocation0]]
  $region30: #{gat_model_forward.5} parent=0
    _
  %s8 = ssub.s32 1, %s6
  %s9 = scalar_select 0, %s8, %s6
  // Predicated region
  $region2: #{gat_model_forward.5} parent=0 // pred_check
    _
  $region3: #{gat_model_forward.5} parent=0 // pred_check_branch
    %11 = sbr.rel (0) target = $region5
  $region4: #{gat_model_forward.5} parent=0 // pred_region
    _
  $region5: #{gat_model_forward.5} parent=0 // pred_fallthru
    _
  // Predicated region
  $region6: #{gat_model_forward.5} parent=0 // pred_check
    _
  $region7: #{gat_model_forward.5} parent=0 // pred_check_branch
    %13 = sbr.rel (0) target = $region9
  $region8: #{gat_model_forward.5} parent=0 // pred_region
    _
  $region9: #{gat_model_forward.5} parent=0 // pred_fallthru
    _
  // Predicated region
  $region10: #{gat_model_forward.5} parent=0 // pred_check
    _
  $region11: #{gat_model_forward.5} parent=0 // pred_check_branch
    %15 = sbr.rel (0) target = $region13
  $region12: #{gat_model_forward.5} parent=0 // pred_region
    _
  $region13: #{gat_model_forward.5} parent=0 // pred_fallthru
    _
  // Predicated region
  $region14: #{gat_model_forward.5} parent=0 // pred_check
    _
  $region15: #{gat_model_forward.5} parent=0 // pred_check_branch
    %17 = sbr.rel (0) target = $region17
  $region16: #{gat_model_forward.5} parent=0 // pred_region
    _
  $region17: #{gat_model_forward.5} parent=0 // pred_fallthru
    _
  // Predicated region
  $region18: #{gat_model_forward.5} parent=0 // pred_check
    _
  $region19: #{gat_model_forward.5} parent=0 // pred_check_branch
    %19 = sbr.rel (0) target = $region21
  $region20: #{gat_model_forward.5} parent=0 // pred_region
    _
  $region21: #{gat_model_forward.5} parent=0 // pred_fallthru
    _
  %v21 = vld [vmem:[%s0] sm:$0xf]
  %v22 = vunpack.c.l.bf16 %v21
  %v23 = vld [vmem:[%s2] sm:$0xff]
  %24 = vxpose.xlu0.b32.start [1/16] %v23, 128
  %25 = vxpose.xlu0.b32.cont [2/16] 0.0, 128
  %26 = vxpose.xlu0.b32.cont [3/16] 0.0, 128
  %27 = vxpose.xlu0.b32.cont [4/16] 0.0, 128
  %28 = vxpose.xlu0.b32.cont [5/16] 0.0, 128
  %29 = vxpose.xlu0.b32.cont [6/16] 0.0, 128
  %30 = vxpose.xlu0.b32.cont [7/16] 0.0, 128
  %31 = vxpose.xlu0.b32.cont [8/16] 0.0, 128
  %32 = vxpose.xlu0.b32.cont [9/16] 0.0, 128
  %33 = vxpose.xlu0.b32.cont [10/16] 0.0, 128
  %34 = vxpose.xlu0.b32.cont [11/16] 0.0, 128
  %35 = vxpose.xlu0.b32.cont [12/16] 0.0, 128
  %36 = vxpose.xlu0.b32.cont [13/16] 0.0, 128
  %37 = vxpose.xlu0.b32.cont [14/16] 0.0, 128
  %38 = vxpose.xlu0.b32.cont [15/16] 0.0, 128
  %39 = vxpose.xlu0.b32.end [16/16] 0.0, 128
  %v40 = vpop.trf.xlu0
  %v41 = vpop.trf.xlu0
  %v42 = vpop.trf.xlu0
  %v43 = vpop.trf.xlu0
  %v44 = vpop.trf.xlu0
  %v45 = vpop.trf.xlu0
  %v46 = vpop.trf.xlu0
  %v47 = vpop.trf.xlu0
  %v48 = vpop.trf.xlu0
  %v49 = vpop.trf.xlu0
  %v50 = vpop.trf.xlu0
  %v51 = vpop.trf.xlu0
  %v52 = vpop.trf.xlu0
  %v53 = vpop.trf.xlu0
  %v54 = vpop.trf.xlu0
  %v55 = vpop.trf.xlu0
  %v56 = vld [vmem:[%s1] sm:$0xff]
  %v57 = vld [vmem:[%s3] sm:$0xf]
  %59 = vset.pattern.permute.xlu0 8
  %60 = vperm.xlu0 %59, %v56
  %v61 = vpop.permute.xlu0 %60
  %v63 = vlaneseq
  %v64 = vshrl.u32 %v63, 7
  %v65 = vsub.s32 0, %v64
  %v66 = vrot.slane %v40, %v65
  %v67 = vadd.f32 %v61, %v66
  %vm68 = vcmp.ge.f32.partialorder %v67, 0.0
  %v69 = vmul.f32 %v67, 0.2
  %v70 = vsel %vm68, %v67, %v69
  %v71 = vadd.f32 %v70, %v22
  %vm72 = vcmask 64512
  %v73 = vsel %vm72, %v71, -inf
  %74 = vmax.xlane.f32.xlu0 %v73
  %v75 = vpop.xlane.xlu0 %74
  %v76 = vsub.f32 %v71, %v75
  %v77 = vmul.f32 %v76, 1.442695
  %v78 = vpow.pop %v77
  %v79 = vsel %vm72, %v78, 0.0
  %80 = vadd.xlane.f32.xlu0 %v79
  %v81 = vpop.xlane.xlu0 %80
  %v82 = vrcp.pop %v81
  %v83 = vpack.c.bf16 %v78, %v78
  %v85 = vsel %vm72, %v83, 0
  %vm87 = vcmask 1043456
  %v89 = vsel %vm87, %v57, 0
  %91 = vmatprep.subr.bf16.mxu0 0
  %92 = vmatpush1.bf16.msra.mxu0 %v89
  %93 = vmatprep.subr.bf16.mxu0 0
  %94 = vmatpush1.bf16.msra.mxu0 0
  %95 = vmatprep.subr.bf16.mxu0 0
  %96 = vmatpush1.bf16.msra.mxu0 0
  %97 = vmatprep.subr.bf16.mxu0 0
  %98 = vmatpush1.bf16.msra.mxu0 0
  %99 = vmatprep.subr.bf16.mxu0 0
  %100 = vmatpush1.bf16.msra.mxu0 0
  %101 = vmatprep.subr.bf16.mxu0 0
  %102 = vmatpush1.bf16.msra.mxu0 0
  %103 = vmatprep.subr.bf16.mxu0 0
  %104 = vmatpush1.bf16.msra.mxu0 0
  %105 = vmatprep.subr.bf16.mxu0 0
  %106 = vmatpush1.bf16.msra.mxu0 0
  %107 = vmatprep.subr.bf16.mxu0 0
  %108 = vmatpush1.bf16.msra.mxu0 0
  %109 = vmatprep.subr.bf16.mxu0 0
  %110 = vmatpush1.bf16.msra.mxu0 0
  %111 = vmatprep.subr.bf16.mxu0 0
  %112 = vmatpush1.bf16.msra.mxu0 0
  %113 = vmatprep.subr.bf16.mxu0 0
  %114 = vmatpush1.bf16.msra.mxu0 0
  %115 = vmatprep.subr.bf16.mxu0 0
  %116 = vmatpush1.bf16.msra.mxu0 0
  %117 = vmatprep.subr.bf16.mxu0 0
  %118 = vmatpush1.bf16.msra.mxu0 0
  %119 = vmatprep.subr.bf16.mxu0 0
  %120 = vmatpush1.bf16.msra.mxu0 0
  %121 = vmatprep.subr.bf16.mxu0 0
  %122 = vmatpush1.bf16.msra.mxu0 0
  %123 = vmatprep.mubr.bf16.mxu0 0
  %124 = vmatmul.mubr.bf16.gmra.mrb[0].mxu0 %v85
  %v125 = vpop.f32.mrb[0].mxu0
  %v126 = vadd.f32 0.0, %v125
  %v127 = vpop.f32.mrb[0].mxu0
  %v128 = vpop.f32.mrb[0].mxu0
  %v129 = vpop.f32.mrb[0].mxu0
  %130 = vdwg.mxu0
  %v131 = vmul.f32 %v126, %v82
  %v132 = vld [vmem:[%s4] sm:$0x1]
  %v134 = vlaneseq
  %v135 = vshrl.u32 %v134, 7
  %v136 = vsub.s32 0, %v135
  %v137 = vrot.slane %v132, %v136
  %v139 = vadd.f32 %v131, %v137
  %vm140 = vcmask 31744
  %141 = vst.msk [vmem:[%s5] sm:$0xff] %vm140, %v139
  // Predicated region
  $region22: #{gat_model_forward.5} parent=0 // pred_check
    _
  $region23: #{gat_model_forward.5} parent=0 // pred_check_branch
    %143 = sbr.rel (0) target = $region25
  $region24: #{gat_model_forward.5} parent=0 // pred_region
    _
  $region25: #{gat_model_forward.5} parent=0 // pred_fallthru
    _
  // Predicated region
  $region26: #{gat_model_forward.5} parent=0 // pred_check
    _
  $region27: #{gat_model_forward.5} parent=0 // pred_check_branch
    %145 = sbr.rel (0) target = $region29
  $region28: #{gat_model_forward.5} parent=0 // pred_region
    _
  $region29: #{gat_model_forward.5} parent=0 // pred_fallthru
    _

// kernel: gat_model_forward.4
$region0: #{gat_model_forward.4}
  #allocation0 [shape = 'u32[]', space=smem, size = 0x4, offset = 0x4, fixed_abs, tag = 'smem constant byte address 0x4 - core index']
  #allocation1 [shape = 'u32[144,128]{1,0:T(1,128)}', space=vmem, size = 0x12000, scoped, tag = 'internal scratch']
  %s0 = inlined_call_operand.vmem [shape: bf16[8,8], index: 0, kind: input, shape index: {}]
  %s1 = inlined_call_operand.vmem [shape: f32[8,16], index: 1, kind: input, shape index: {}, may-alias: {1,2}]
  %s2 = inlined_call_operand.vmem [shape: f32[8,16], index: 2, kind: input, shape index: {}, may-alias: {1,2}]
  %s3 = inlined_call_operand.vmem [shape: bf16[8,32], index: 3, kind: input, shape index: {}]
  %s4 = inlined_call_operand.vmem [shape: f32[1,32], index: 4, kind: input, shape index: {}]
  %s5 = inlined_call_operand.vmem [shape: f32[32,4], index: 5, kind: input, shape index: {}]
  %s6 = inlined_call_operand.vmem [shape: f32[4,16], index: 6, kind: input, shape index: {}]
  %s7 = inlined_call_operand.vmem [shape: bf16[8,4], index: 7, kind: output, shape index: {0}]
  %s8 = inlined_call_operand.vmem [shape: f32[8,16], index: 8, kind: output, shape index: {1}]
  %9 = xla_tuple %s7, %s8
  %s10 = sld [smem:[#allocation0]]
  $region46: #{gat_model_forward.4} parent=0
    _
  %s12 = ssub.s32 1, %s10
  %s13 = scalar_select 0, %s12, %s10
  // Predicated region
  $region2: #{gat_model_forward.4} parent=0 // pred_check
    _
  $region3: #{gat_model_forward.4} parent=0 // pred_check_branch
    %15 = sbr.rel (0) target = $region5
  $region4: #{gat_model_forward.4} parent=0 // pred_region
    _
  $region5: #{gat_model_forward.4} parent=0 // pred_fallthru
    _
  // Predicated region
  $region6: #{gat_model_forward.4} parent=0 // pred_check
    _
  $region7: #{gat_model_forward.4} parent=0 // pred_check_branch
    %17 = sbr.rel (0) target = $region9
  $region8: #{gat_model_forward.4} parent=0 // pred_region
    _
  $region9: #{gat_model_forward.4} parent=0 // pred_fallthru
    _
  // Predicated region
  $region10: #{gat_model_forward.4} parent=0 // pred_check
    _
  $region11: #{gat_model_forward.4} parent=0 // pred_check_branch
    %19 = sbr.rel (0) target = $region13
  $region12: #{gat_model_forward.4} parent=0 // pred_region
    _
  $region13: #{gat_model_forward.4} parent=0 // pred_fallthru
    _
  // Predicated region
  $region14: #{gat_model_forward.4} parent=0 // pred_check
    _
  $region15: #{gat_model_forward.4} parent=0 // pred_check_branch
    %21 = sbr.rel (0) target = $region17
  $region16: #{gat_model_forward.4} parent=0 // pred_region
    _
  $region17: #{gat_model_forward.4} parent=0 // pred_fallthru
    _
  // Predicated region
  $region18: #{gat_model_forward.4} parent=0 // pred_check
    _
  $region19: #{gat_model_forward.4} parent=0 // pred_check_branch
    %23 = sbr.rel (0) target = $region21
  $region20: #{gat_model_forward.4} parent=0 // pred_region
    _
  $region21: #{gat_model_forward.4} parent=0 // pred_fallthru
    _
  // Predicated region
  $region22: #{gat_model_forward.4} parent=0 // pred_check
    _
  $region23: #{gat_model_forward.4} parent=0 // pred_check_branch
    %25 = sbr.rel (0) target = $region25
  $region24: #{gat_model_forward.4} parent=0 // pred_region
    _
  $region25: #{gat_model_forward.4} parent=0 // pred_fallthru
    _
  // Predicated region
  $region26: #{gat_model_forward.4} parent=0 // pred_check
    _
  $region27: #{gat_model_forward.4} parent=0 // pred_check_branch
    %27 = sbr.rel (0) target = $region29
  $region28: #{gat_model_forward.4} parent=0 // pred_region
    _
  $region29: #{gat_model_forward.4} parent=0 // pred_fallthru
    _
  %v29 = vld [vmem:[%s0] sm:$0xf]
  %v30 = vunpack.c.l.bf16 %v29
  %v31 = vld [vmem:[%s2] sm:$0xff]
  %32 = vxpose.xlu0.b32.start [1/16] %v31, 128
  %33 = vxpose.xlu0.b32.cont [2/16] 0.0, 128
  %34 = vxpose.xlu0.b32.cont [3/16] 0.0, 128
  %35 = vxpose.xlu0.b32.cont [4/16] 0.0, 128
  %36 = vxpose.xlu0.b32.cont [5/16] 0.0, 128
  %37 = vxpose.xlu0.b32.cont [6/16] 0.0, 128
  %38 = vxpose.xlu0.b32.cont [7/16] 0.0, 128
  %39 = vxpose.xlu0.b32.cont [8/16] 0.0, 128
  %40 = vxpose.xlu0.b32.cont [9/16] 0.0, 128
  %41 = vxpose.xlu0.b32.cont [10/16] 0.0, 128
  %42 = vxpose.xlu0.b32.cont [11/16] 0.0, 128
  %43 = vxpose.xlu0.b32.cont [12/16] 0.0, 128
  %44 = vxpose.xlu0.b32.cont [13/16] 0.0, 128
  %45 = vxpose.xlu0.b32.cont [14/16] 0.0, 128
  %46 = vxpose.xlu0.b32.cont [15/16] 0.0, 128
  %47 = vxpose.xlu0.b32.end [16/16] 0.0, 128
  %v48 = vpop.trf.xlu0
  %v49 = vpop.trf.xlu0
  %v50 = vpop.trf.xlu0
  %v51 = vpop.trf.xlu0
  %v52 = vpop.trf.xlu0
  %v53 = vpop.trf.xlu0
  %v54 = vpop.trf.xlu0
  %v55 = vpop.trf.xlu0
  %v56 = vpop.trf.xlu0
  %v57 = vpop.trf.xlu0
  %v58 = vpop.trf.xlu0
  %v59 = vpop.trf.xlu0
  %v60 = vpop.trf.xlu0
  %v61 = vpop.trf.xlu0
  %v62 = vpop.trf.xlu0
  %v63 = vpop.trf.xlu0
  %v64 = vld [vmem:[%s1] sm:$0xff]
  %v65 = vld [vmem:[%s3] sm:$0xf]
  %67 = vset.pattern.permute.xlu0 8
  %68 = vperm.xlu0 %67, %v64
  %v69 = vpop.permute.xlu0 %68
  %v71 = vlaneseq
  %v72 = vshrl.u32 %v71, 7
  %v73 = vsub.s32 0, %v72
  %v74 = vrot.slane %v48, %v73
  %v75 = vadd.f32 %v69, %v74
  %vm76 = vcmp.ge.f32.partialorder %v75, 0.0
  %v77 = vmul.f32 %v75, 0.2
  %v78 = vsel %vm76, %v75, %v77
  %v79 = vadd.f32 %v78, %v30
  %vm80 = vcmask 64512
  %v81 = vsel %vm80, %v79, -inf
  %82 = vmax.xlane.f32.xlu0 %v81
  %v83 = vpop.xlane.xlu0 %82
  %v84 = vsub.f32 %v79, %v83
  %v85 = vmul.f32 %v84, 1.442695
  %v86 = vpow.pop %v85
  %v87 = vsel %vm80, %v86, 0.0
  %88 = vadd.xlane.f32.xlu0 %v87
  %v89 = vpop.xlane.xlu0 %88
  %v90 = vrcp.pop %v89
  %v91 = vpack.c.bf16 %v86, %v86
  %v93 = vsel %vm80, %v91, 0
  %vm95 = vcmask 1043456
  %v97 = vsel %vm95, %v65, 0
  %99 = vmatprep.subr.bf16.mxu0 0
  %100 = vmatpush1.bf16.msra.mxu0 %v97
  %101 = vmatprep.subr.bf16.mxu0 0
  %102 = vmatpush1.bf16.msra.mxu0 0
  %103 = vmatprep.subr.bf16.mxu0 0
  %104 = vmatpush1.bf16.msra.mxu0 0
  %105 = vmatprep.subr.bf16.mxu0 0
  %106 = vmatpush1.bf16.msra.mxu0 0
  %107 = vmatprep.subr.bf16.mxu0 0
  %108 = vmatpush1.bf16.msra.mxu0 0
  %109 = vmatprep.subr.bf16.mxu0 0
  %110 = vmatpush1.bf16.msra.mxu0 0
  %111 = vmatprep.subr.bf16.mxu0 0
  %112 = vmatpush1.bf16.msra.mxu0 0
  %113 = vmatprep.subr.bf16.mxu0 0
  %114 = vmatpush1.bf16.msra.mxu0 0
  %115 = vmatprep.subr.bf16.mxu0 0
  %116 = vmatpush1.bf16.msra.mxu0 0
  %117 = vmatprep.subr.bf16.mxu0 0
  %118 = vmatpush1.bf16.msra.mxu0 0
  %119 = vmatprep.subr.bf16.mxu0 0
  %120 = vmatpush1.bf16.msra.mxu0 0
  %121 = vmatprep.subr.bf16.mxu0 0
  %122 = vmatpush1.bf16.msra.mxu0 0
  %123 = vmatprep.subr.bf16.mxu0 0
  %124 = vmatpush1.bf16.msra.mxu0 0
  %125 = vmatprep.subr.bf16.mxu0 0
  %126 = vmatpush1.bf16.msra.mxu0 0
  %127 = vmatprep.subr.bf16.mxu0 0
  %128 = vmatpush1.bf16.msra.mxu0 0
  %129 = vmatprep.subr.bf16.mxu0 0
  %130 = vmatpush1.bf16.msra.mxu0 0
  %131 = vmatprep.mubr.bf16.mxu0 0
  %132 = vmatmul.mubr.bf16.gmra.mrb[0].mxu0 %v93
  %v133 = vpop.f32.mrb[0].mxu0
  %v134 = vadd.f32 0.0, %v133
  %v135 = vpop.f32.mrb[0].mxu0
  %v136 = vpop.f32.mrb[0].mxu0
  %v137 = vpop.f32.mrb[0].mxu0
  %138 = vdwg.mxu0
  %v139 = vmul.f32 %v134, %v90
  %140 = vset.pattern.permute.xlu0 9
  %141 = vperm.xlu0 %140, %v64
  %v142 = vpop.permute.xlu0 %141
  %v144 = vlaneseq
  %v145 = vshrl.u32 %v144, 7
  %v146 = vsub.s32 1, %v145
  %v147 = vrot.slane %v48, %v146
  %v148 = vadd.f32 %v142, %v147
  %vm149 = vcmp.ge.f32.partialorder %v148, 0.0
  %v150 = vmul.f32 %v148, 0.2
  %v151 = vsel %vm149, %v148, %v150
  %v152 = vadd.f32 %v151, %v30
  %v153 = vsel %vm80, %v152, -inf
  %154 = vmax.xlane.f32.xlu0 %v153
  %v155 = vpop.xlane.xlu0 %154
  %v156 = vsub.f32 %v152, %v155
  %v157 = vmul.f32 %v156, 1.442695
  %v158 = vpow.pop %v157
  %v159 = vsel %vm80, %v158, 0.0
  %160 = vadd.xlane.f32.xlu0 %v159
  %v161 = vpop.xlane.xlu0 %160
  %v162 = vrcp.pop %v161
  %v163 = vpack.c.bf16 %v158, %v158
  %v165 = vunpack.c.l.b16 %v65
  %v166 = vpack.c.b16 %v165, %v165
  %167 = vrot.lane.b32.xlu0 %v166, 120
  %v168 = vpop.permute.xlu0 %167
  %v170 = vsel %vm80, %v163, 0
  %v173 = vsel %vm95, %v168, 0
  %175 = vmatprep.subr.bf16.mxu0 0
  %176 = vmatpush1.bf16.msra.mxu0 %v173
  %177 = vmatprep.subr.bf16.mxu0 0
  %178 = vmatpush1.bf16.msra.mxu0 0
  %179 = vmatprep.subr.bf16.mxu0 0
  %180 = vmatpush1.bf16.msra.mxu0 0
  %181 = vmatprep.subr.bf16.mxu0 0
  %182 = vmatpush1.bf16.msra.mxu0 0
  %183 = vmatprep.subr.bf16.mxu0 0
  %184 = vmatpush1.bf16.msra.mxu0 0
  %185 = vmatprep.subr.bf16.mxu0 0
  %186 = vmatpush1.bf16.msra.mxu0 0
  %187 = vmatprep.subr.bf16.mxu0 0
  %188 = vmatpush1.bf16.msra.mxu0 0
  %189 = vmatprep.subr.bf16.mxu0 0
  %190 = vmatpush1.bf16.msra.mxu0 0
  %191 = vmatprep.subr.bf16.mxu0 0
  %192 = vmatpush1.bf16.msra.mxu0 0
  %193 = vmatprep.subr.bf16.mxu0 0
  %194 = vmatpush1.bf16.msra.mxu0 0
  %195 = vmatprep.subr.bf16.mxu0 0
  %196 = vmatpush1.bf16.msra.mxu0 0
  %197 = vmatprep.subr.bf16.mxu0 0
  %198 = vmatpush1.bf16.msra.mxu0 0
  %199 = vmatprep.subr.bf16.mxu0 0
  %200 = vmatpush1.bf16.msra.mxu0 0
  %201 = vmatprep.subr.bf16.mxu0 0
  %202 = vmatpush1.bf16.msra.mxu0 0
  %203 = vmatprep.subr.bf16.mxu0 0
  %204 = vmatpush1.bf16.msra.mxu0 0
  %205 = vmatprep.subr.bf16.mxu0 0
  %206 = vmatpush1.bf16.msra.mxu0 0
  %207 = vmatprep.mubr.bf16.mxu0 0
  %208 = vmatmul.mubr.bf16.gmra.mrb[0].mxu0 %v170
  %v209 = vpop.f32.mrb[0].mxu0
  %v210 = vadd.f32 0.0, %v209
  %v211 = vpop.f32.mrb[0].mxu0
  %v212 = vpop.f32.mrb[0].mxu0
  %v213 = vpop.f32.mrb[0].mxu0
  %214 = vdwg.mxu0
  %v215 = vmul.f32 %v210, %v162
  %216 = vset.pattern.permute.xlu0 10
  %217 = vperm.xlu0 %216, %v64
  %v218 = vpop.permute.xlu0 %217
  %v220 = vlaneseq
  %v221 = vshrl.u32 %v220, 7
  %v222 = vsub.s32 2, %v221
  %v223 = vrot.slane %v48, %v222
  %v224 = vadd.f32 %v218, %v223
  %vm225 = vcmp.ge.f32.partialorder %v224, 0.0
  %v226 = vmul.f32 %v224, 0.2
  %v227 = vsel %vm225, %v224, %v226
  %v228 = vadd.f32 %v227, %v30
  %v229 = vsel %vm80, %v228, -inf
  %230 = vmax.xlane.f32.xlu0 %v229
  %v231 = vpop.xlane.xlu0 %230
  %v232 = vsub.f32 %v228, %v231
  %v233 = vmul.f32 %v232, 1.442695
  %v234 = vpow.pop %v233
  %v235 = vsel %vm80, %v234, 0.0
  %236 = vadd.xlane.f32.xlu0 %v235
  %v237 = vpop.xlane.xlu0 %236
  %v238 = vrcp.pop %v237
  %v239 = vpack.c.bf16 %v234, %v234
  %240 = vrot.lane.b32.xlu0 %v166, 112
  %v241 = vpop.permute.xlu0 %240
  %v243 = vsel %vm80, %v239, 0
  %v246 = vsel %vm95, %v241, 0
  %248 = vmatprep.subr.bf16.mxu0 0
  %249 = vmatpush1.bf16.msra.mxu0 %v246
  %250 = vmatprep.subr.bf16.mxu0 0
  %251 = vmatpush1.bf16.msra.mxu0 0
  %252 = vmatprep.subr.bf16.mxu0 0
  %253 = vmatpush1.bf16.msra.mxu0 0
  %254 = vmatprep.subr.bf16.mxu0 0
  %255 = vmatpush1.bf16.msra.mxu0 0
  %256 = vmatprep.subr.bf16.mxu0 0
  %257 = vmatpush1.bf16.msra.mxu0 0
  %258 = vmatprep.subr.bf16.mxu0 0
  %259 = vmatpush1.bf16.msra.mxu0 0
  %260 = vmatprep.subr.bf16.mxu0 0
  %261 = vmatpush1.bf16.msra.mxu0 0
  %262 = vmatprep.subr.bf16.mxu0 0
  %263 = vmatpush1.bf16.msra.mxu0 0
  %264 = vmatprep.subr.bf16.mxu0 0
  %265 = vmatpush1.bf16.msra.mxu0 0
  %266 = vmatprep.subr.bf16.mxu0 0
  %267 = vmatpush1.bf16.msra.mxu0 0
  %268 = vmatprep.subr.bf16.mxu0 0
  %269 = vmatpush1.bf16.msra.mxu0 0
  %270 = vmatprep.subr.bf16.mxu0 0
  %271 = vmatpush1.bf16.msra.mxu0 0
  %272 = vmatprep.subr.bf16.mxu0 0
  %273 = vmatpush1.bf16.msra.mxu0 0
  %274 = vmatprep.subr.bf16.mxu0 0
  %275 = vmatpush1.bf16.msra.mxu0 0
  %276 = vmatprep.subr.bf16.mxu0 0
  %277 = vmatpush1.bf16.msra.mxu0 0
  %278 = vmatprep.subr.bf16.mxu0 0
  %279 = vmatpush1.bf16.msra.mxu0 0
  %280 = vmatprep.mubr.bf16.mxu0 0
  %281 = vmatmul.mubr.bf16.gmra.mrb[0].mxu0 %v243
  %v282 = vpop.f32.mrb[0].mxu0
  %v283 = vadd.f32 0.0, %v282
  %v284 = vpop.f32.mrb[0].mxu0
  %v285 = vpop.f32.mrb[0].mxu0
  %v286 = vpop.f32.mrb[0].mxu0
  %287 = vdwg.mxu0
  %v288 = vmul.f32 %v283, %v238
  %289 = vset.pattern.permute.xlu0 11
  %290 = vperm.xlu0 %289, %v64
  %v291 = vpop.permute.xlu0 %290
  %v293 = vlaneseq
  %v294 = vshrl.u32 %v293, 7
  %v295 = vsub.s32 3, %v294
  %v296 = vrot.slane %v48, %v295
  %v297 = vadd.f32 %v291, %v296
  %vm298 = vcmp.ge.f32.partialorder %v297, 0.0
  %v299 = vmul.f32 %v297, 0.2
  %v300 = vsel %vm298, %v297, %v299
  %v301 = vadd.f32 %v300, %v30
  %v302 = vsel %vm80, %v301, -inf
  %303 = vmax.xlane.f32.xlu0 %v302
  %v304 = vpop.xlane.xlu0 %303
  %v305 = vsub.f32 %v301, %v304
  %v306 = vmul.f32 %v305, 1.442695
  %v307 = vpow.pop %v306
  %v308 = vsel %vm80, %v307, 0.0
  %309 = vadd.xlane.f32.xlu0 %v308
  %v310 = vpop.xlane.xlu0 %309
  %v311 = vrcp.pop %v310
  %v312 = vpack.c.bf16 %v307, %v307
  %313 = vrot.lane.b32.xlu0 %v166, 104
  %v314 = vpop.permute.xlu0 %313
  %v316 = vsel %vm80, %v312, 0
  %v319 = vsel %vm95, %v314, 0
  %321 = vmatprep.subr.bf16.mxu0 0
  %322 = vmatpush1.bf16.msra.mxu0 %v319
  %323 = vmatprep.subr.bf16.mxu0 0
  %324 = vmatpush1.bf16.msra.mxu0 0
  %325 = vmatprep.subr.bf16.mxu0 0
  %326 = vmatpush1.bf16.msra.mxu0 0
  %327 = vmatprep.subr.bf16.mxu0 0
  %328 = vmatpush1.bf16.msra.mxu0 0
  %329 = vmatprep.subr.bf16.mxu0 0
  %330 = vmatpush1.bf16.msra.mxu0 0
  %331 = vmatprep.subr.bf16.mxu0 0
  %332 = vmatpush1.bf16.msra.mxu0 0
  %333 = vmatprep.subr.bf16.mxu0 0
  %334 = vmatpush1.bf16.msra.mxu0 0
  %335 = vmatprep.subr.bf16.mxu0 0
  %336 = vmatpush1.bf16.msra.mxu0 0
  %337 = vmatprep.subr.bf16.mxu0 0
  %338 = vmatpush1.bf16.msra.mxu0 0
  %339 = vmatprep.subr.bf16.mxu0 0
  %340 = vmatpush1.bf16.msra.mxu0 0
  %341 = vmatprep.subr.bf16.mxu0 0
  %342 = vmatpush1.bf16.msra.mxu0 0
  %343 = vmatprep.subr.bf16.mxu0 0
  %344 = vmatpush1.bf16.msra.mxu0 0
  %345 = vmatprep.subr.bf16.mxu0 0
  %346 = vmatpush1.bf16.msra.mxu0 0
  %347 = vmatprep.subr.bf16.mxu0 0
  %348 = vmatpush1.bf16.msra.mxu0 0
  %349 = vmatprep.subr.bf16.mxu0 0
  %350 = vmatpush1.bf16.msra.mxu0 0
  %351 = vmatprep.subr.bf16.mxu0 0
  %352 = vmatpush1.bf16.msra.mxu0 0
  %353 = vmatprep.mubr.bf16.mxu0 0
  %354 = vmatmul.mubr.bf16.gmra.mrb[0].mxu0 %v316
  %v355 = vpop.f32.mrb[0].mxu0
  %v356 = vadd.f32 0.0, %v355
  %v357 = vpop.f32.mrb[0].mxu0
  %v358 = vpop.f32.mrb[0].mxu0
  %v359 = vpop.f32.mrb[0].mxu0
  %360 = vdwg.mxu0
  %v361 = vmul.f32 %v356, %v311
  %363 = vrot.lane.b32.xlu0 %v215, 8
  %v364 = vpop.permute.xlu0 %363
  %367 = vrot.lane.b32.xlu0 %v288, 16
  %v368 = vpop.permute.xlu0 %367
  %371 = vrot.lane.b32.xlu0 %v361, 24
  %v372 = vpop.permute.xlu0 %371
  %v374 = vsel %vm80, %v139, %v364
  %vm375 = vcmask 130048
  %v376 = vsel %vm375, %v374, %v368
  %vm377 = vcmask 195584
  %v378 = vsel %vm377, %v376, %v372
  %v379 = vld [vmem:[%s4] sm:$0x1]
  %v381 = vlaneseq
  %v382 = vshrl.u32 %v381, 7
  %v383 = vsub.s32 0, %v382
  %v384 = vrot.slane %v379, %v383
  %v386 = vadd.f32 %v378, %v384
  %v387 = vmax.f32 %v386, 0.0
  %v388 = vpack.c.bf16 %v387, %v387
  %v389 = vld [vmem:[%s5] sm:$0xff]
  %v390 = vld [vmem:[%s5 + $0x8] sm:$0xff]
  %v391 = vld [vmem:[%s5 + $0x10] sm:$0xff]
  %v392 = vld [vmem:[%s5 + $0x18] sm:$0xff]
  %v393 = vpack.c.bf16 %v390, %v389
  %v394 = vpack.c.bf16 %v392, %v391
  %vm395 = vcmask 261120
  %v397 = vsel %vm395, %v388, 0
  %399 = vmatprep.subr.bf16.mxu0 0
  %400 = vmatpush1.bf16.msra.mxu0 %v393
  %401 = vmatprep.subr.bf16.mxu0 0
  %402 = vmatpush1.bf16.msra.mxu0 %v394
  %403 = vmatprep.subr.bf16.mxu0 0
  %404 = vmatpush1.bf16.msra.mxu0 0
  %405 = vmatprep.subr.bf16.mxu0 0
  %406 = vmatpush1.bf16.msra.mxu0 0
  %407 = vmatprep.subr.bf16.mxu0 0
  %408 = vmatpush1.bf16.msra.mxu0 0
  %409 = vmatprep.subr.bf16.mxu0 0
  %410 = vmatpush1.bf16.msra.mxu0 0
  %411 = vmatprep.subr.bf16.mxu0 0
  %412 = vmatpush1.bf16.msra.mxu0 0
  %413 = vmatprep.subr.bf16.mxu0 0
  %414 = vmatpush1.bf16.msra.mxu0 0
  %415 = vmatprep.subr.bf16.mxu0 0
  %416 = vmatpush1.bf16.msra.mxu0 0
  %417 = vmatprep.subr.bf16.mxu0 0
  %418 = vmatpush1.bf16.msra.mxu0 0
  %419 = vmatprep.subr.bf16.mxu0 0
  %420 = vmatpush1.bf16.msra.mxu0 0
  %421 = vmatprep.subr.bf16.mxu0 0
  %422 = vmatpush1.bf16.msra.mxu0 0
  %423 = vmatprep.subr.bf16.mxu0 0
  %424 = vmatpush1.bf16.msra.mxu0 0
  %425 = vmatprep.subr.bf16.mxu0 0
  %426 = vmatpush1.bf16.msra.mxu0 0
  %427 = vmatprep.subr.bf16.mxu0 0
  %428 = vmatpush1.bf16.msra.mxu0 0
  %429 = vmatprep.subr.bf16.mxu0 0
  %430 = vmatpush1.bf16.msra.mxu0 0
  %431 = vmatprep.mubr.bf16.mxu0 0
  %432 = vmatmul.mubr.bf16.gmra.mrb[0].mxu0 %v397
  %v433 = vpop.f32.mrb[0].mxu0
  %v434 = vadd.f32 0.0, %v433
  %v435 = vpop.f32.mrb[0].mxu0
  %v436 = vpop.f32.mrb[0].mxu0
  %v437 = vpop.f32.mrb[0].mxu0
  %438 = vdwg.mxu0
  %v439 = vld [vmem:[%s6] sm:$0xf]
  %vm440 = vcmask 31744
  %v442 = vsel %vm440, %v434, 0
  %v445 = vsel %vm95, %v439, 0
  %447 = vmatprep.subr.mxu0 0.0
  %448 = vmatpush1.msra.mxu0 %v445
  %449 = vmatprep.subr.mxu0 0.0
  %450 = vmatpush1.msra.mxu0 0.0
  %451 = vmatprep.subr.mxu0 0.0
  %452 = vmatpush1.msra.mxu0 0.0
  %453 = vmatprep.subr.mxu0 0.0
  %454 = vmatpush1.msra.mxu0 0.0
  %455 = vmatprep.subr.mxu0 0.0
  %456 = vmatpush1.msra.mxu0 0.0
  %457 = vmatprep.subr.mxu0 0.0
  %458 = vmatpush1.msra.mxu0 0.0
  %459 = vmatprep.subr.mxu0 0.0
  %460 = vmatpush1.msra.mxu0 0.0
  %461 = vmatprep.subr.mxu0 0.0
  %462 = vmatpush1.msra.mxu0 0.0
  %463 = vmatprep.subr.mxu0 0.0
  %464 = vmatpush1.msra.mxu0 0.0
  %465 = vmatprep.subr.mxu0 0.0
  %466 = vmatpush1.msra.mxu0 0.0
  %467 = vmatprep.subr.mxu0 0.0
  %468 = vmatpush1.msra.mxu0 0.0
  %469 = vmatprep.subr.mxu0 0.0
  %470 = vmatpush1.msra.mxu0 0.0
  %471 = vmatprep.subr.mxu0 0.0
  %472 = vmatpush1.msra.mxu0 0.0
  %473 = vmatprep.subr.mxu0 0.0
  %474 = vmatpush1.msra.mxu0 0.0
  %475 = vmatprep.subr.mxu0 0.0
  %476 = vmatpush1.msra.mxu0 0.0
  %477 = vmatprep.subr.mxu0 0.0
  %478 = vmatpush1.msra.mxu0 0.0
  %479 = vmatprep.subr.mxu0 0.0
  %480 = vmatpush1.msra.mxu0 0.0
  %481 = vmatprep.subr.mxu0 0.0
  %482 = vmatpush1.msra.mxu0 0.0
  %483 = vmatprep.subr.mxu0 0.0
  %484 = vmatpush1.msra.mxu0 0.0
  %485 = vmatprep.subr.mxu0 0.0
  %486 = vmatpush1.msra.mxu0 0.0
  %487 = vmatprep.subr.mxu0 0.0
  %488 = vmatpush1.msra.mxu0 0.0
  %489 = vmatprep.subr.mxu0 0.0
  %490 = vmatpush1.msra.mxu0 0.0
  %491 = vmatprep.subr.mxu0 0.0
  %492 = vmatpush1.msra.mxu0 0.0
  %493 = vmatprep.subr.mxu0 0.0
  %494 = vmatpush1.msra.mxu0 0.0
  %495 = vmatprep.subr.mxu0 0.0
  %496 = vmatpush1.msra.mxu0 0.0
  %497 = vmatprep.subr.mxu0 0.0
  %498 = vmatpush1.msra.mxu0 0.0
  %499 = vmatprep.subr.mxu0 0.0
  %500 = vmatpush1.msra.mxu0 0.0
  %501 = vmatprep.subr.mxu0 0.0
  %502 = vmatpush1.msra.mxu0 0.0
  %503 = vmatprep.subr.mxu0 0.0
  %504 = vmatpush1.msra.mxu0 0.0
  %505 = vmatprep.subr.mxu0 0.0
  %506 = vmatpush1.msra.mxu0 0.0
  %507 = vmatprep.subr.mxu0 0.0
  %508 = vmatpush1.msra.mxu0 0.0
  %509 = vmatprep.subr.mxu0 0.0
  %510 = vmatpush1.msra.mxu0 0.0
  %511 = vmatprep.mubr.f32.mxu0 0.0
  %512 = vmatmul.mubr.f32.gmra.mrb[0].mxu0 %v442
  %v513 = vpop.f32.mrb[0].mxu0
  %v514 = vadd.f32 0.0, %v513
  %v515 = vpop.f32.mrb[0].mxu0
  %516 = vdwg.mxu0
  %517 = vst.msk [vmem:[%s8] sm:$0xff] %vm375, %v514
  %v518 = vpack.c.bf16 %v434, %v434
  %vm519 = vcmask 27648
  %520 = vst.msk [vmem:[%s7] sm:$0xf] %vm519, %v518
  // Predicated region
  $region30: #{gat_model_forward.4} parent=0 // pred_check
    _
  $region31: #{gat_model_forward.4} parent=0 // pred_check_branch
    %522 = sbr.rel (0) target = $region33
  $region32: #{gat_model_forward.4} parent=0 // pred_region
    _
  $region33: #{gat_model_forward.4} parent=0 // pred_fallthru
    _
  // Predicated region
  $region34: #{gat_model_forward.4} parent=0 // pred_check
    _
  $region35: #{gat_model_forward.4} parent=0 // pred_check_branch
    %524 = sbr.rel (0) target = $region37
  $region36: #{gat_model_forward.4} parent=0 // pred_region
    _
  $region37: #{gat_model_forward.4} parent=0 // pred_fallthru
    _
  // Predicated region
  $region38: #{gat_model_forward.4} parent=0 // pred_check
    _
  $region39: #{gat_model_forward.4} parent=0 // pred_check_branch
    %526 = sbr.rel (0) target = $region41
  $region40: #{gat_model_forward.4} parent=0 // pred_region
    _
  $region41: #{gat_model_forward.4} parent=0 // pred_fallthru
    _
  // Predicated region
  $region42: #{gat_model_forward.4} parent=0 // pred_check
    _
  $region43: #{gat_model_forward.4} parent=0 // pred_check_branch
    %528 = sbr.rel (0) target = $region45
  $region44: #{gat_model_forward.4} parent=0 // pred_region
    _
  $region45: #{gat_model_forward.4} parent=0 // pred_fallthru
    _

</llo_original>
